<compile_context>
chip_gen: v5e
topology: v5e:2x2
jax: 0.10.0
libtpu: 0.0.40
codegen_flags: <defaults>
</compile_context>

<pallas_src>
import jax
import jax.numpy as jnp
from jax.experimental import pallas as pl
from jax.experimental.pallas import tpu as pltpu

K = 7          # conv kernel size
PAD = 3        # conv padding
KP = 8         # taps padded to 8 groups -> packed contraction width = 8*C
SE_HID = 128   # SE hidden dim zero-padded to a full lane group for the FCs


def basic_block_kernel(x_ref, w1_ref, s1_ref, b1_ref, w2_ref, s2_ref, b2_ref,
                       fc1_ref, fc2_ref, o_ref,
                       hal_ref, xp_ref, act_ref, se_ref):
    """Fused BasicBlock forward (eval mode), whole batch in one invocation.

    x_ref  : (B, L, C)      f32  NLC input (true channel count)
    w*_ref : (KP*C, C)      bf16 tap-packed conv weights (row k*C + ci)
    s*/b*  : (1, C)         f32  folded BatchNorm scale / bias
    fc1    : (C, SE_HID)    f32  SE squeeze FC (hidden dim zero-padded)
    fc2    : (SE_HID, C)    f32  SE excite FC
    o_ref  : (B, L, C)      f32  output
    hal_ref: (B*(L+6), C)   f32  scratch: zero-haloed flat activations
    xp_ref : (M, KP*C)      f32  scratch: tap-packed matmul LHS, M = B*(L+6)-6
    act_ref: (M, C)         f32  scratch: conv1 / conv2 elementwise results
    se_ref : (B, C)         f32  scratch: per-batch pooled stats / SE gate
    """
    B, L, C = x_ref.shape
    Lp = L + 2 * PAD
    M = B * Lp - 2 * PAD

    # Halo rows and the padded 8th tap group stay zero for the whole kernel
    # (interior cells are fully overwritten before every use).
    hal_ref[...] = jnp.zeros_like(hal_ref)
    xp_ref[:, K * C:] = jnp.zeros((M, (KP - K) * C), jnp.float32)

    def packed_conv(w_ref):
        # xp[r, k*C + ci] = hal[r + k, ci]  ->  conv == ONE dense matmul.
        for k in range(K):
            xp_ref[:, k * C:(k + 1) * C] = hal_ref[k:k + M, :]
        return jnp.dot(xp_ref[...].astype(jnp.bfloat16), w_ref[...],
                       preferred_element_type=jnp.float32)            # (M, C)

    # ---- conv1 (k=7, pad=3, no bias) -> BN1 (folded) -> ReLU --------------
    for b in range(B):
        hal_ref[b * Lp + PAD:b * Lp + PAD + L, :] = x_ref[b]
    res1 = packed_conv(w1_ref)
    act_ref[...] = jnp.maximum(res1 * s1_ref[...] + b1_ref[...], 0.0)
    # TODO(synk): dropout implemented as identity (eval-mode semantics).

    # ---- conv2 -> BN2 (folded) --------------------------------------------
    for b in range(B):
        hal_ref[b * Lp + PAD:b * Lp + PAD + L, :] = \
            act_ref[b * Lp:b * Lp + L, :]
    res2 = packed_conv(w2_ref)
    act_ref[...] = res2 * s2_ref[...] + b2_ref[...]

    # ---- SE: avg-pool over length -> FC -> ReLU -> FC -> sigmoid ----------
    for b in range(B):
        se_ref[b:b + 1, :] = jnp.mean(act_ref[b * Lp:b * Lp + L, :],
                                      axis=0, keepdims=True)
    h1 = jnp.maximum(jnp.dot(se_ref[...], fc1_ref[...],
                             preferred_element_type=jnp.float32), 0.0)
    se_ref[...] = jax.nn.sigmoid(jnp.dot(h1, fc2_ref[...],
                                         preferred_element_type=jnp.float32))

    # ---- channel scale + residual add + ReLU (identity path) --------------
    for b in range(B):
        o_ref[b] = jnp.maximum(
            act_ref[b * Lp:b * Lp + L, :] * se_ref[b:b + 1, :] + x_ref[b],
            0.0)


def prepare_params(params):
    """One-time parameter prep (hoisted out of the per-forward path):
    tap-packing + bf16 cast of conv weights, SE hidden padding, BN already
    folded into (scale, bias)."""
    C = params["w1_oik"].shape[0]
    hid = params["wfc1"].shape[1]
    hp = max(SE_HID, hid)

    def pack_conv(w_oik):
        # (Cout, Cin, K) -> tap-major rows (K*Cin, Cout), pad taps to KP, bf16
        wt = jnp.transpose(w_oik, (2, 1, 0)).reshape(K * C, C)
        wt = jnp.pad(wt, ((0, (KP - K) * C), (0, 0)))
        return wt.astype(jnp.bfloat16)

    return dict(
        w1p=pack_conv(params["w1_oik"]),
        w2p=pack_conv(params["w2_oik"]),
        s1=params["s1"][None, :], b1=params["b1"][None, :],
        s2=params["s2"][None, :], b2=params["b2"][None, :],
        wfc1=jnp.pad(params["wfc1"], ((0, 0), (0, hp - hid))),
        wfc2=jnp.pad(params["wfc2"], ((0, hp - hid), (0, 0))),
    )


def basic_block_nlc(x_nlc, prep):
    """Forward on NLC (B, L, C) activations — no transposes, true-C HBM I/O."""
    B, L, C = x_nlc.shape
    Lp = L + 2 * PAD
    R = B * Lp
    M = R - 2 * PAD

    def full_spec(shape):
        n = len(shape)
        return pl.BlockSpec(shape, lambda i: (0,) * n)

    return pl.pallas_call(
        basic_block_kernel,
        out_shape=jax.ShapeDtypeStruct((B, L, C), jnp.float32),
        grid=(1,),   # batch folded into the matmul M axis
        in_specs=[
            full_spec((B, L, C)),
            full_spec((KP * C, C)), full_spec((1, C)), full_spec((1, C)),
            full_spec((KP * C, C)), full_spec((1, C)), full_spec((1, C)),
            full_spec(prep["wfc1"].shape), full_spec(prep["wfc2"].shape),
        ],
        out_specs=full_spec((B, L, C)),
        scratch_shapes=[
            pltpu.VMEM((R, C), jnp.float32),        # zero-haloed activations
            pltpu.VMEM((M, KP * C), jnp.float32),   # tap-packed matmul LHS
            pltpu.VMEM((M, C), jnp.float32),        # conv results (elementwise)
            pltpu.VMEM((B, C), jnp.float32),        # SE pooled stats / gate
        ],
        compiler_params=pltpu.CompilerParams(
            dimension_semantics=("arbitrary",)),
    )(x_nlc, prep["w1p"], prep["s1"], prep["b1"],
      prep["w2p"], prep["s2"], prep["b2"], prep["wfc1"], prep["wfc2"])


def basic_block_pallas(x_ncl, params, prep=None):
    """Module-facing adapter: (B, C, L) -> (B, C, L).

    In a full network, keep activations NLC and call basic_block_nlc directly
    so these two transposes (extra HBM round trips) disappear."""
    if prep is None:
        prep = prepare_params(params)
    B, Cin, L = x_ncl.shape
    assert Cin == params["w1_oik"].shape[0], \
        "identity residual requires inplanes == planes"
    out_nlc = basic_block_nlc(jnp.transpose(x_ncl, (0, 2, 1)), prep)
    return jnp.transpose(out_nlc, (0, 2, 1))


def ref_forward(x_ncl, params):
    """Pure-JAX reference (eval mode).  Conv operands cast to bf16 to mirror
    the kernel's MXU precision; accumulation and everything else in f32."""
    bf = jnp.bfloat16

    def conv(x, w):
        return jax.lax.conv_general_dilated(
            x.astype(bf), w.astype(bf), window_strides=(1,),
            padding=[(PAD, PAD)], dimension_numbers=("NCH", "OIH", "NCH"),
            preferred_element_type=jnp.float32)

    out = conv(x_ncl, params["w1_oik"])
    out = out * params["s1"][None, :, None] + params["b1"][None, :, None]
    out = jnp.maximum(out, 0.0)
    out = conv(out, params["w2_oik"])
    out = out * params["s2"][None, :, None] + params["b2"][None, :, None]
    y = jnp.mean(out, axis=2)                                    # (B, C)
    h1 = jnp.maximum(jnp.dot(y, params["wfc1"]), 0.0)
    gate = jax.nn.sigmoid(jnp.dot(h1, params["wfc2"]))
    out = out * gate[:, :, None]
    return jnp.maximum(out + x_ncl, 0.0)


def make_params(key, inplanes, planes, reduction=16):
    ks = jax.random.split(key, 10)
    eps = 1e-5
    w1 = jax.random.normal(ks[0], (planes, inplanes, K), jnp.float32) * 0.1
    w2 = jax.random.normal(ks[1], (planes, planes, K), jnp.float32) * 0.1
    # BatchNorm params + running stats, folded into scale/bias (eval mode)
    g1 = 1.0 + 0.1 * jax.random.normal(ks[2], (planes,), jnp.float32)
    be1 = 0.1 * jax.random.normal(ks[3], (planes,), jnp.float32)
    m1 = 0.1 * jax.random.normal(ks[4], (planes,), jnp.float32)
    v1 = jnp.abs(jax.random.normal(ks[5], (planes,), jnp.float32)) + 0.5
    g2 = 1.0 + 0.1 * jax.random.normal(ks[6], (planes,), jnp.float32)
    be2 = 0.1 * jax.random.normal(ks[7], (planes,), jnp.float32)
    m2 = 0.1 * jax.random.normal(ks[8], (planes,), jnp.float32)
    v2 = jnp.abs(jax.random.normal(ks[9], (planes,), jnp.float32)) + 0.5
    s1 = g1 / jnp.sqrt(v1 + eps)
    b1 = be1 - m1 * s1
    s2 = g2 / jnp.sqrt(v2 + eps)
    b2 = be2 - m2 * s2
    hid = planes // reduction
    kf1, kf2 = jax.random.split(jax.random.fold_in(key, 77))
    # PyTorch Linear weights are (out, in); store transposed for y @ W^T
    wfc1 = jax.random.normal(kf1, (hid, planes), jnp.float32).T * 0.2  # (C,hid)
    wfc2 = jax.random.normal(kf2, (planes, hid), jnp.float32).T * 0.2  # (hid,C)
    return dict(w1_oik=w1, w2_oik=w2, s1=s1, b1=b1, s2=s2, b2=b2,
                wfc1=wfc1, wfc2=wfc2)


if __name__ == "__main__":
    key = jax.random.PRNGKey(0)
    kx, kp = jax.random.split(key)

    B, C, L = 2, 32, 64              # inplanes = planes = 32, stride = 1
    x = jax.random.normal(kx, (B, C, L), jnp.float32)
    params = make_params(kp, C, C)
    prep = prepare_params(params)    # one-time weight prep (hoisted)

    out = jax.block_until_ready(basic_block_pallas(x, params, prep))
    ref = jax.block_until_ready(ref_forward(x, params))

    assert out.shape == (B, C, L)
    err = jnp.max(jnp.abs(out - ref))
    # bf16 MXU operands -> slightly looser tolerance than pure f32
    assert jnp.allclose(out, ref, atol=1e-2, rtol=1e-2), f"max abs err {err}"
    print("KERNEL_OK")
</pallas_src>

<mosaic_0001>
module attributes {stable_mosaic.version = 11 : i64} {
  func.func @basic_block_kernel(%arg0: i32, %arg1: memref<2x64x32xf32, #tpu.memory_space<vmem>>, %arg2: memref<256x32xbf16, #tpu.memory_space<vmem>>, %arg3: memref<1x32xf32, #tpu.memory_space<vmem>>, %arg4: memref<1x32xf32, #tpu.memory_space<vmem>>, %arg5: memref<256x32xbf16, #tpu.memory_space<vmem>>, %arg6: memref<1x32xf32, #tpu.memory_space<vmem>>, %arg7: memref<1x32xf32, #tpu.memory_space<vmem>>, %arg8: memref<32x128xf32, #tpu.memory_space<vmem>>, %arg9: memref<128x32xf32, #tpu.memory_space<vmem>>, %arg10: memref<2x64x32xf32, #tpu.memory_space<vmem>>, %arg11: memref<140x32xf32, #tpu.memory_space<vmem>>, %arg12: memref<134x256xf32, #tpu.memory_space<vmem>>, %arg13: memref<134x32xf32, #tpu.memory_space<vmem>>, %arg14: memref<2x32xf32, #tpu.memory_space<vmem>>) attributes {dimension_semantics = [#tpu.dimension_semantics<arbitrary>], iteration_bounds = array<i64: 1>, scalar_prefetch = 0 : i64, scratch_operands = 4 : i64, tpu.core_type = #tpu.core_type<tc>, window_params = [{pipeline_mode = #tpu.pipeline_mode<synchronous>, transform_indices = @transform_0, window_bounds = array<i64: 2, 64, 32>}, {pipeline_mode = #tpu.pipeline_mode<synchronous>, transform_indices = @transform_1, window_bounds = array<i64: 256, 32>}, {pipeline_mode = #tpu.pipeline_mode<synchronous>, transform_indices = @transform_2, window_bounds = array<i64: 1, 32>}, {pipeline_mode = #tpu.pipeline_mode<synchronous>, transform_indices = @transform_3, window_bounds = array<i64: 1, 32>}, {pipeline_mode = #tpu.pipeline_mode<synchronous>, transform_indices = @transform_4, window_bounds = array<i64: 256, 32>}, {pipeline_mode = #tpu.pipeline_mode<synchronous>, transform_indices = @transform_5, window_bounds = array<i64: 1, 32>}, {pipeline_mode = #tpu.pipeline_mode<synchronous>, transform_indices = @transform_6, window_bounds = array<i64: 1, 32>}, {pipeline_mode = #tpu.pipeline_mode<synchronous>, transform_indices = @transform_7, window_bounds = array<i64: 32, 128>}, {pipeline_mode = #tpu.pipeline_mode<synchronous>, transform_indices = @transform_8, window_bounds = array<i64: 128, 32>}, {pipeline_mode = #tpu.pipeline_mode<synchronous>, transform_indices = @transform_9, window_bounds = array<i64: 2, 64, 32>}]} {
    %cst = arith.constant 0.000000e+00 : f32
    %0 = vector.broadcast %cst : f32 to vector<140x32xf32>
    %c0 = arith.constant 0 : index
    %c0_0 = arith.constant 0 : index
    %1 = vector.load %arg11[%c0, %c0_0] : memref<140x32xf32, #tpu.memory_space<vmem>>, vector<140x32xf32>
    tpu.vector_store %arg11[%c0, %c0_0], %0 {strides = array<i32>} : memref<140x32xf32, #tpu.memory_space<vmem>>, vector<140x32xf32>,
    %cst_1 = arith.constant 0.000000e+00 : f32
    %2 = vector.broadcast %cst_1 : f32 to vector<134x32xf32>
    %c0_2 = arith.constant 0 : index
    %c224 = arith.constant 224 : index
    %3 = vector.load %arg12[%c0_2, %c224] : memref<134x256xf32, #tpu.memory_space<vmem>>, vector<134x32xf32>
    tpu.vector_store %arg12[%c0_2, %c224], %2 {strides = array<i32>} : memref<134x256xf32, #tpu.memory_space<vmem>>, vector<134x32xf32>,
    %c0_3 = arith.constant 0 : index
    %c0_4 = arith.constant 0 : index
    %c0_5 = arith.constant 0 : index
    %4 = vector.load %arg1[%c0_3, %c0_4, %c0_5] : memref<2x64x32xf32, #tpu.memory_space<vmem>>, vector<1x64x32xf32>
    %5 = vector.shape_cast %4 : vector<1x64x32xf32> to vector<64x32xf32>
    %c3 = arith.constant 3 : index
    %c0_6 = arith.constant 0 : index
    %6 = vector.load %arg11[%c3, %c0_6] : memref<140x32xf32, #tpu.memory_space<vmem>>, vector<64x32xf32>
    tpu.vector_store %arg11[%c3, %c0_6], %5 {strides = array<i32>} : memref<140x32xf32, #tpu.memory_space<vmem>>, vector<64x32xf32>,
    %c1 = arith.constant 1 : index
    %c0_7 = arith.constant 0 : index
    %c0_8 = arith.constant 0 : index
    %7 = vector.load %arg1[%c1, %c0_7, %c0_8] : memref<2x64x32xf32, #tpu.memory_space<vmem>>, vector<1x64x32xf32>
    %8 = vector.shape_cast %7 : vector<1x64x32xf32> to vector<64x32xf32>
    %c73 = arith.constant 73 : index
    %c0_9 = arith.constant 0 : index
    %9 = vector.load %arg11[%c73, %c0_9] : memref<140x32xf32, #tpu.memory_space<vmem>>, vector<64x32xf32>
    tpu.vector_store %arg11[%c73, %c0_9], %8 {strides = array<i32>} : memref<140x32xf32, #tpu.memory_space<vmem>>, vector<64x32xf32>,
    %c0_10 = arith.constant 0 : index
    %c0_11 = arith.constant 0 : index
    %10 = vector.load %arg11[%c0_10, %c0_11] : memref<140x32xf32, #tpu.memory_space<vmem>>, vector<134x32xf32>
    %c0_12 = arith.constant 0 : index
    %c0_13 = arith.constant 0 : index
    %11 = vector.load %arg12[%c0_12, %c0_13] : memref<134x256xf32, #tpu.memory_space<vmem>>, vector<134x32xf32>
    tpu.vector_store %arg12[%c0_12, %c0_13], %10 {strides = array<i32>} : memref<134x256xf32, #tpu.memory_space<vmem>>, vector<134x32xf32>,
    %c1_14 = arith.constant 1 : index
    %c0_15 = arith.constant 0 : index
    %12 = vector.load %arg11[%c1_14, %c0_15] : memref<140x32xf32, #tpu.memory_space<vmem>>, vector<134x32xf32>
    %c0_16 = arith.constant 0 : index
    %c32 = arith.constant 32 : index
    %13 = vector.load %arg12[%c0_16, %c32] : memref<134x256xf32, #tpu.memory_space<vmem>>, vector<134x32xf32>
    tpu.vector_store %arg12[%c0_16, %c32], %12 {strides = array<i32>} : memref<134x256xf32, #tpu.memory_space<vmem>>, vector<134x32xf32>,
    %c2 = arith.constant 2 : index
    %c0_17 = arith.constant 0 : index
    %14 = vector.load %arg11[%c2, %c0_17] : memref<140x32xf32, #tpu.memory_space<vmem>>, vector<134x32xf32>
    %c0_18 = arith.constant 0 : index
    %c64 = arith.constant 64 : index
    %15 = vector.load %arg12[%c0_18, %c64] : memref<134x256xf32, #tpu.memory_space<vmem>>, vector<134x32xf32>
    tpu.vector_store %arg12[%c0_18, %c64], %14 {strides = array<i32>} : memref<134x256xf32, #tpu.memory_space<vmem>>, vector<134x32xf32>,
    %c3_19 = arith.constant 3 : index
    %c0_20 = arith.constant 0 : index
    %16 = vector.load %arg11[%c3_19, %c0_20] : memref<140x32xf32, #tpu.memory_space<vmem>>, vector<134x32xf32>
    %c0_21 = arith.constant 0 : index
    %c96 = arith.constant 96 : index
    %17 = vector.load %arg12[%c0_21, %c96] : memref<134x256xf32, #tpu.memory_space<vmem>>, vector<134x32xf32>
    tpu.vector_store %arg12[%c0_21, %c96], %16 {strides = array<i32>} : memref<134x256xf32, #tpu.memory_space<vmem>>, vector<134x32xf32>,
    %c4 = arith.constant 4 : index
    %c0_22 = arith.constant 0 : index
    %18 = vector.load %arg11[%c4, %c0_22] : memref<140x32xf32, #tpu.memory_space<vmem>>, vector<134x32xf32>
    %c0_23 = arith.constant 0 : index
    %c128 = arith.constant 128 : index
    %19 = vector.load %arg12[%c0_23, %c128] : memref<134x256xf32, #tpu.memory_space<vmem>>, vector<134x32xf32>
    tpu.vector_store %arg12[%c0_23, %c128], %18 {strides = array<i32>} : memref<134x256xf32, #tpu.memory_space<vmem>>, vector<134x32xf32>,
    %c5 = arith.constant 5 : index
    %c0_24 = arith.constant 0 : index
    %20 = vector.load %arg11[%c5, %c0_24] : memref<140x32xf32, #tpu.memory_space<vmem>>, vector<134x32xf32>
    %c0_25 = arith.constant 0 : index
    %c160 = arith.constant 160 : index
    %21 = vector.load %arg12[%c0_25, %c160] : memref<134x256xf32, #tpu.memory_space<vmem>>, vector<134x32xf32>
    tpu.vector_store %arg12[%c0_25, %c160], %20 {strides = array<i32>} : memref<134x256xf32, #tpu.memory_space<vmem>>, vector<134x32xf32>,
    %c6 = arith.constant 6 : index
    %c0_26 = arith.constant 0 : index
    %22 = vector.load %arg11[%c6, %c0_26] : memref<140x32xf32, #tpu.memory_space<vmem>>, vector<134x32xf32>
    %c0_27 = arith.constant 0 : index
    %c192 = arith.constant 192 : index
    %23 = vector.load %arg12[%c0_27, %c192] : memref<134x256xf32, #tpu.memory_space<vmem>>, vector<134x32xf32>
    tpu.vector_store %arg12[%c0_27, %c192], %22 {strides = array<i32>} : memref<134x256xf32, #tpu.memory_space<vmem>>, vector<134x32xf32>,
    %c0_28 = arith.constant 0 : index
    %c0_29 = arith.constant 0 : index
    %24 = vector.load %arg12[%c0_28, %c0_29] : memref<134x256xf32, #tpu.memory_space<vmem>>, vector<134x256xf32>
    %25 = arith.truncf %24 : vector<134x256xf32> to vector<134x256xbf16>
    %c0_30 = arith.constant 0 : index
    %c0_31 = arith.constant 0 : index
    %26 = vector.load %arg2[%c0_30, %c0_31] : memref<256x32xbf16, #tpu.memory_space<vmem>>, vector<256x32xbf16>
    %cst_32 = arith.constant dense<0.000000e+00> : vector<134x32xf32>
    %27 = tpu.matmul %25, %26, %cst_32 {dimension_numbers = #tpu.dot_dimension_numbers<[1], [0], [0], [1], [0, 0, 1, 1], [], []>} : vector<134x256xbf16>, vector<256x32xbf16>, vector<134x32xf32> -> vector<134x32xf32>
    %c0_33 = arith.constant 0 : index
    %c0_34 = arith.constant 0 : index
    %28 = vector.load %arg3[%c0_33, %c0_34] : memref<1x32xf32, #tpu.memory_space<vmem>>, vector<1x32xf32>
    %29 = vector.broadcast %28 : vector<1x32xf32> to vector<134x32xf32>
    %30 = arith.mulf %27, %29 : vector<134x32xf32>
    %c0_35 = arith.constant 0 : index
    %c0_36 = arith.constant 0 : index
    %31 = vector.load %arg4[%c0_35, %c0_36] : memref<1x32xf32, #tpu.memory_space<vmem>>, vector<1x32xf32>
    %32 = vector.broadcast %31 : vector<1x32xf32> to vector<134x32xf32>
    %33 = arith.addf %30, %32 : vector<134x32xf32>
    %cst_37 = arith.constant 0.000000e+00 : f32
    %34 = vector.broadcast %cst_37 : f32 to vector<134x32xf32>
    %35 = arith.maximumf %33, %34 : vector<134x32xf32>
    %c0_38 = arith.constant 0 : index
    %c0_39 = arith.constant 0 : index
    %36 = vector.load %arg13[%c0_38, %c0_39] : memref<134x32xf32, #tpu.memory_space<vmem>>, vector<134x32xf32>
    tpu.vector_store %arg13[%c0_38, %c0_39], %35 {strides = array<i32>} : memref<134x32xf32, #tpu.memory_space<vmem>>, vector<134x32xf32>,
    %c0_40 = arith.constant 0 : index
    %c0_41 = arith.constant 0 : index
    %37 = vector.load %arg13[%c0_40, %c0_41] : memref<134x32xf32, #tpu.memory_space<vmem>>, vector<64x32xf32>
    %c3_42 = arith.constant 3 : index
    %c0_43 = arith.constant 0 : index
    %38 = vector.load %arg11[%c3_42, %c0_43] : memref<140x32xf32, #tpu.memory_space<vmem>>, vector<64x32xf32>
    tpu.vector_store %arg11[%c3_42, %c0_43], %37 {strides = array<i32>} : memref<140x32xf32, #tpu.memory_space<vmem>>, vector<64x32xf32>,
    %c70 = arith.constant 70 : index
    %c0_44 = arith.constant 0 : index
    %39 = vector.load %arg13[%c70, %c0_44] : memref<134x32xf32, #tpu.memory_space<vmem>>, vector<64x32xf32>
    %c73_45 = arith.constant 73 : index
    %c0_46 = arith.constant 0 : index
    %40 = vector.load %arg11[%c73_45, %c0_46] : memref<140x32xf32, #tpu.memory_space<vmem>>, vector<64x32xf32>
    tpu.vector_store %arg11[%c73_45, %c0_46], %39 {strides = array<i32>} : memref<140x32xf32, #tpu.memory_space<vmem>>, vector<64x32xf32>,
    %c0_47 = arith.constant 0 : index
    %c0_48 = arith.constant 0 : index
    %41 = vector.load %arg11[%c0_47, %c0_48] : memref<140x32xf32, #tpu.memory_space<vmem>>, vector<134x32xf32>
    %c0_49 = arith.constant 0 : index
    %c0_50 = arith.constant 0 : index
    %42 = vector.load %arg12[%c0_49, %c0_50] : memref<134x256xf32, #tpu.memory_space<vmem>>, vector<134x32xf32>
    tpu.vector_store %arg12[%c0_49, %c0_50], %41 {strides = array<i32>} : memref<134x256xf32, #tpu.memory_space<vmem>>, vector<134x32xf32>,
    %c1_51 = arith.constant 1 : index
    %c0_52 = arith.constant 0 : index
    %43 = vector.load %arg11[%c1_51, %c0_52] : memref<140x32xf32, #tpu.memory_space<vmem>>, vector<134x32xf32>
    %c0_53 = arith.constant 0 : index
    %c32_54 = arith.constant 32 : index
    %44 = vector.load %arg12[%c0_53, %c32_54] : memref<134x256xf32, #tpu.memory_space<vmem>>, vector<134x32xf32>
    tpu.vector_store %arg12[%c0_53, %c32_54], %43 {strides = array<i32>} : memref<134x256xf32, #tpu.memory_space<vmem>>, vector<134x32xf32>,
    %c2_55 = arith.constant 2 : index
    %c0_56 = arith.constant 0 : index
    %45 = vector.load %arg11[%c2_55, %c0_56] : memref<140x32xf32, #tpu.memory_space<vmem>>, vector<134x32xf32>
    %c0_57 = arith.constant 0 : index
    %c64_58 = arith.constant 64 : index
    %46 = vector.load %arg12[%c0_57, %c64_58] : memref<134x256xf32, #tpu.memory_space<vmem>>, vector<134x32xf32>
    tpu.vector_store %arg12[%c0_57, %c64_58], %45 {strides = array<i32>} : memref<134x256xf32, #tpu.memory_space<vmem>>, vector<134x32xf32>,
    %c3_59 = arith.constant 3 : index
    %c0_60 = arith.constant 0 : index
    %47 = vector.load %arg11[%c3_59, %c0_60] : memref<140x32xf32, #tpu.memory_space<vmem>>, vector<134x32xf32>
    %c0_61 = arith.constant 0 : index
    %c96_62 = arith.constant 96 : index
    %48 = vector.load %arg12[%c0_61, %c96_62] : memref<134x256xf32, #tpu.memory_space<vmem>>, vector<134x32xf32>
    tpu.vector_store %arg12[%c0_61, %c96_62], %47 {strides = array<i32>} : memref<134x256xf32, #tpu.memory_space<vmem>>, vector<134x32xf32>,
    %c4_63 = arith.constant 4 : index
    %c0_64 = arith.constant 0 : index
    %49 = vector.load %arg11[%c4_63, %c0_64] : memref<140x32xf32, #tpu.memory_space<vmem>>, vector<134x32xf32>
    %c0_65 = arith.constant 0 : index
    %c128_66 = arith.constant 128 : index
    %50 = vector.load %arg12[%c0_65, %c128_66] : memref<134x256xf32, #tpu.memory_space<vmem>>, vector<134x32xf32>
    tpu.vector_store %arg12[%c0_65, %c128_66], %49 {strides = array<i32>} : memref<134x256xf32, #tpu.memory_space<vmem>>, vector<134x32xf32>,
    %c5_67 = arith.constant 5 : index
    %c0_68 = arith.constant 0 : index
    %51 = vector.load %arg11[%c5_67, %c0_68] : memref<140x32xf32, #tpu.memory_space<vmem>>, vector<134x32xf32>
    %c0_69 = arith.constant 0 : index
    %c160_70 = arith.constant 160 : index
    %52 = vector.load %arg12[%c0_69, %c160_70] : memref<134x256xf32, #tpu.memory_space<vmem>>, vector<134x32xf32>
    tpu.vector_store %arg12[%c0_69, %c160_70], %51 {strides = array<i32>} : memref<134x256xf32, #tpu.memory_space<vmem>>, vector<134x32xf32>,
    %c6_71 = arith.constant 6 : index
    %c0_72 = arith.constant 0 : index
    %53 = vector.load %arg11[%c6_71, %c0_72] : memref<140x32xf32, #tpu.memory_space<vmem>>, vector<134x32xf32>
    %c0_73 = arith.constant 0 : index
    %c192_74 = arith.constant 192 : index
    %54 = vector.load %arg12[%c0_73, %c192_74] : memref<134x256xf32, #tpu.memory_space<vmem>>, vector<134x32xf32>
    tpu.vector_store %arg12[%c0_73, %c192_74], %53 {strides = array<i32>} : memref<134x256xf32, #tpu.memory_space<vmem>>, vector<134x32xf32>,
    %c0_75 = arith.constant 0 : index
    %c0_76 = arith.constant 0 : index
    %55 = vector.load %arg12[%c0_75, %c0_76] : memref<134x256xf32, #tpu.memory_space<vmem>>, vector<134x256xf32>
    %56 = arith.truncf %55 : vector<134x256xf32> to vector<134x256xbf16>
    %c0_77 = arith.constant 0 : index
    %c0_78 = arith.constant 0 : index
    %57 = vector.load %arg5[%c0_77, %c0_78] : memref<256x32xbf16, #tpu.memory_space<vmem>>, vector<256x32xbf16>
    %cst_79 = arith.constant dense<0.000000e+00> : vector<134x32xf32>
    %58 = tpu.matmul %56, %57, %cst_79 {dimension_numbers = #tpu.dot_dimension_numbers<[1], [0], [0], [1], [0, 0, 1, 1], [], []>} : vector<134x256xbf16>, vector<256x32xbf16>, vector<134x32xf32> -> vector<134x32xf32>
    %c0_80 = arith.constant 0 : index
    %c0_81 = arith.constant 0 : index
    %59 = vector.load %arg6[%c0_80, %c0_81] : memref<1x32xf32, #tpu.memory_space<vmem>>, vector<1x32xf32>
    %60 = vector.broadcast %59 : vector<1x32xf32> to vector<134x32xf32>
    %61 = arith.mulf %58, %60 : vector<134x32xf32>
    %c0_82 = arith.constant 0 : index
    %c0_83 = arith.constant 0 : index
    %62 = vector.load %arg7[%c0_82, %c0_83] : memref<1x32xf32, #tpu.memory_space<vmem>>, vector<1x32xf32>
    %63 = vector.broadcast %62 : vector<1x32xf32> to vector<134x32xf32>
    %64 = arith.addf %61, %63 : vector<134x32xf32>
    %c0_84 = arith.constant 0 : index
    %c0_85 = arith.constant 0 : index
    %65 = vector.load %arg13[%c0_84, %c0_85] : memref<134x32xf32, #tpu.memory_space<vmem>>, vector<134x32xf32>
    tpu.vector_store %arg13[%c0_84, %c0_85], %64 {strides = array<i32>} : memref<134x32xf32, #tpu.memory_space<vmem>>, vector<134x32xf32>,
    %c0_86 = arith.constant 0 : index
    %c0_87 = arith.constant 0 : index
    %66 = vector.load %arg13[%c0_86, %c0_87] : memref<134x32xf32, #tpu.memory_space<vmem>>, vector<64x32xf32>
    %cst_88 = arith.constant dense<0.000000e+00> : vector<32xf32>
    %67 = vector.multi_reduction <add>, %66, %cst_88 [0] : vector<64x32xf32> to vector<32xf32>
    %68 = vector.shape_cast %67 : vector<32xf32> to vector<1x32xf32>
    %cst_89 = arith.constant 6.400000e+01 : f32
    %69 = vector.broadcast %cst_89 : f32 to vector<1x32xf32>
    %70 = arith.divf %68, %69 : vector<1x32xf32>
    %c0_90 = arith.constant 0 : index
    %c0_91 = arith.constant 0 : index
    %71 = vector.load %arg14[%c0_90, %c0_91] : memref<2x32xf32, #tpu.memory_space<vmem>>, vector<1x32xf32>
    tpu.vector_store %arg14[%c0_90, %c0_91], %70 {strides = array<i32>} : memref<2x32xf32, #tpu.memory_space<vmem>>, vector<1x32xf32>,
    %c70_92 = arith.constant 70 : index
    %c0_93 = arith.constant 0 : index
    %72 = vector.load %arg13[%c70_92, %c0_93] : memref<134x32xf32, #tpu.memory_space<vmem>>, vector<64x32xf32>
    %cst_94 = arith.constant dense<0.000000e+00> : vector<32xf32>
    %73 = vector.multi_reduction <add>, %72, %cst_94 [0] : vector<64x32xf32> to vector<32xf32>
    %74 = vector.shape_cast %73 : vector<32xf32> to vector<1x32xf32>
    %cst_95 = arith.constant 6.400000e+01 : f32
    %75 = vector.broadcast %cst_95 : f32 to vector<1x32xf32>
    %76 = arith.divf %74, %75 : vector<1x32xf32>
    %c1_96 = arith.constant 1 : index
    %c0_97 = arith.constant 0 : index
    %77 = vector.load %arg14[%c1_96, %c0_97] : memref<2x32xf32, #tpu.memory_space<vmem>>, vector<1x32xf32>
    tpu.vector_store %arg14[%c1_96, %c0_97], %76 {strides = array<i32>} : memref<2x32xf32, #tpu.memory_space<vmem>>, vector<1x32xf32>,
    %c0_98 = arith.constant 0 : index
    %c0_99 = arith.constant 0 : index
    %78 = vector.load %arg14[%c0_98, %c0_99] : memref<2x32xf32, #tpu.memory_space<vmem>>, vector<2x32xf32>
    %c0_100 = arith.constant 0 : index
    %c0_101 = arith.constant 0 : index
    %79 = vector.load %arg8[%c0_100, %c0_101] : memref<32x128xf32, #tpu.memory_space<vmem>>, vector<32x128xf32>
    %cst_102 = arith.constant dense<0.000000e+00> : vector<2x128xf32>
    %80 = tpu.matmul %78, %79, %cst_102 {dimension_numbers = #tpu.dot_dimension_numbers<[1], [0], [0], [1], [0, 0, 1, 1], [], []>} : vector<2x32xf32>, vector<32x128xf32>, vector<2x128xf32> -> vector<2x128xf32>
    %cst_103 = arith.constant 0.000000e+00 : f32
    %81 = vector.broadcast %cst_103 : f32 to vector<2x128xf32>
    %82 = arith.maximumf %80, %81 : vector<2x128xf32>
    %c0_104 = arith.constant 0 : index
    %c0_105 = arith.constant 0 : index
    %83 = vector.load %arg9[%c0_104, %c0_105] : memref<128x32xf32, #tpu.memory_space<vmem>>, vector<128x32xf32>
    %cst_106 = arith.constant dense<0.000000e+00> : vector<2x32xf32>
    %84 = tpu.matmul %82, %83, %cst_106 {dimension_numbers = #tpu.dot_dimension_numbers<[1], [0], [0], [1], [0, 0, 1, 1], [], []>} : vector<2x128xf32>, vector<128x32xf32>, vector<2x32xf32> -> vector<2x32xf32>
    %85 = arith.negf %84 : vector<2x32xf32>
    %86 = math.exp %85 : vector<2x32xf32>
    %cst_107 = arith.constant 1.000000e+00 : f32
    %87 = vector.broadcast %cst_107 : f32 to vector<2x32xf32>
    %88 = arith.addf %87, %86 : vector<2x32xf32>
    %89 = arith.divf %87, %88 : vector<2x32xf32>
    %c0_108 = arith.constant 0 : index
    %c0_109 = arith.constant 0 : index
    %90 = vector.load %arg14[%c0_108, %c0_109] : memref<2x32xf32, #tpu.memory_space<vmem>>, vector<2x32xf32>
    tpu.vector_store %arg14[%c0_108, %c0_109], %89 {strides = array<i32>} : memref<2x32xf32, #tpu.memory_space<vmem>>, vector<2x32xf32>,
    %c0_110 = arith.constant 0 : index
    %c0_111 = arith.constant 0 : index
    %91 = vector.load %arg13[%c0_110, %c0_111] : memref<134x32xf32, #tpu.memory_space<vmem>>, vector<64x32xf32>
    %c0_112 = arith.constant 0 : index
    %c0_113 = arith.constant 0 : index
    %92 = vector.load %arg14[%c0_112, %c0_113] : memref<2x32xf32, #tpu.memory_space<vmem>>, vector<1x32xf32>
    %93 = vector.broadcast %92 : vector<1x32xf32> to vector<64x32xf32>
    %94 = arith.mulf %91, %93 : vector<64x32xf32>
    %c0_114 = arith.constant 0 : index
    %c0_115 = arith.constant 0 : index
    %c0_116 = arith.constant 0 : index
    %95 = vector.load %arg1[%c0_114, %c0_115, %c0_116] : memref<2x64x32xf32, #tpu.memory_space<vmem>>, vector<1x64x32xf32>
    %96 = vector.shape_cast %95 : vector<1x64x32xf32> to vector<64x32xf32>
    %97 = arith.addf %94, %96 : vector<64x32xf32>
    %cst_117 = arith.constant 0.000000e+00 : f32
    %98 = vector.broadcast %cst_117 : f32 to vector<64x32xf32>
    %99 = arith.maximumf %97, %98 : vector<64x32xf32>
    %c0_118 = arith.constant 0 : index
    %c0_119 = arith.constant 0 : index
    %c0_120 = arith.constant 0 : index
    %100 = vector.load %arg10[%c0_118, %c0_119, %c0_120] : memref<2x64x32xf32, #tpu.memory_space<vmem>>, vector<1x64x32xf32>
    %101 = vector.shape_cast %100 : vector<1x64x32xf32> to vector<64x32xf32>
    %102 = vector.shape_cast %99 : vector<64x32xf32> to vector<1x64x32xf32>
    tpu.vector_store %arg10[%c0_118, %c0_119, %c0_120], %102 {strides = array<i32>} : memref<2x64x32xf32, #tpu.memory_space<vmem>>, vector<1x64x32xf32>,
    %c70_121 = arith.constant 70 : index
    %c0_122 = arith.constant 0 : index
    %103 = vector.load %arg13[%c70_121, %c0_122] : memref<134x32xf32, #tpu.memory_space<vmem>>, vector<64x32xf32>
    %c1_123 = arith.constant 1 : index
    %c0_124 = arith.constant 0 : index
    %104 = vector.load %arg14[%c1_123, %c0_124] : memref<2x32xf32, #tpu.memory_space<vmem>>, vector<1x32xf32>
    %105 = vector.broadcast %104 : vector<1x32xf32> to vector<64x32xf32>
    %106 = arith.mulf %103, %105 : vector<64x32xf32>
    %c1_125 = arith.constant 1 : index
    %c0_126 = arith.constant 0 : index
    %c0_127 = arith.constant 0 : index
    %107 = vector.load %arg1[%c1_125, %c0_126, %c0_127] : memref<2x64x32xf32, #tpu.memory_space<vmem>>, vector<1x64x32xf32>
    %108 = vector.shape_cast %107 : vector<1x64x32xf32> to vector<64x32xf32>
    %109 = arith.addf %106, %108 : vector<64x32xf32>
    %cst_128 = arith.constant 0.000000e+00 : f32
    %110 = vector.broadcast %cst_128 : f32 to vector<64x32xf32>
    %111 = arith.maximumf %109, %110 : vector<64x32xf32>
    %c1_129 = arith.constant 1 : index
    %c0_130 = arith.constant 0 : index
    %c0_131 = arith.constant 0 : index
    %112 = vector.load %arg10[%c1_129, %c0_130, %c0_131] : memref<2x64x32xf32, #tpu.memory_space<vmem>>, vector<1x64x32xf32>
    %113 = vector.shape_cast %112 : vector<1x64x32xf32> to vector<64x32xf32>
    %114 = vector.shape_cast %111 : vector<64x32xf32> to vector<1x64x32xf32>
    tpu.vector_store %arg10[%c1_129, %c0_130, %c0_131], %114 {strides = array<i32>} : memref<2x64x32xf32, #tpu.memory_space<vmem>>, vector<1x64x32xf32>,
    return
  }
  func.func @transform_0(%arg0: i32) -> (i32, i32, i32) {
    %c0_i32 = arith.constant 0 : i32
    %c0_i32_0 = arith.constant 0 : i32
    %c0_i32_1 = arith.constant 0 : i32
    %c0_i32_2 = arith.constant 0 : i32
    return %c0_i32, %c0_i32_0, %c0_i32_1 : i32, i32, i32
  }
  func.func @transform_1(%arg0: i32) -> (i32, i32) {
    %c0_i32 = arith.constant 0 : i32
    %c0_i32_0 = arith.constant 0 : i32
    %c0_i32_1 = arith.constant 0 : i32
    return %c0_i32, %c0_i32_0 : i32, i32
  }
  func.func @transform_2(%arg0: i32) -> (i32, i32) {
    %c0_i32 = arith.constant 0 : i32
    %c0_i32_0 = arith.constant 0 : i32
    %c0_i32_1 = arith.constant 0 : i32
    return %c0_i32, %c0_i32_0 : i32, i32
  }
  func.func @transform_3(%arg0: i32) -> (i32, i32) {
    %c0_i32 = arith.constant 0 : i32
    %c0_i32_0 = arith.constant 0 : i32
    %c0_i32_1 = arith.constant 0 : i32
    return %c0_i32, %c0_i32_0 : i32, i32
  }
  func.func @transform_4(%arg0: i32) -> (i32, i32) {
    %c0_i32 = arith.constant 0 : i32
    %c0_i32_0 = arith.constant 0 : i32
    %c0_i32_1 = arith.constant 0 : i32
    return %c0_i32, %c0_i32_0 : i32, i32
  }
  func.func @transform_5(%arg0: i32) -> (i32, i32) {
    %c0_i32 = arith.constant 0 : i32
    %c0_i32_0 = arith.constant 0 : i32
    %c0_i32_1 = arith.constant 0 : i32
    return %c0_i32, %c0_i32_0 : i32, i32
  }
  func.func @transform_6(%arg0: i32) -> (i32, i32) {
    %c0_i32 = arith.constant 0 : i32
    %c0_i32_0 = arith.constant 0 : i32
    %c0_i32_1 = arith.constant 0 : i32
    return %c0_i32, %c0_i32_0 : i32, i32
  }
  func.func @transform_7(%arg0: i32) -> (i32, i32) {
    %c0_i32 = arith.constant 0 : i32
    %c0_i32_0 = arith.constant 0 : i32
    %c0_i32_1 = arith.constant 0 : i32
    return %c0_i32, %c0_i32_0 : i32, i32
  }
  func.func @transform_8(%arg0: i32) -> (i32, i32) {
    %c0_i32 = arith.constant 0 : i32
    %c0_i32_0 = arith.constant 0 : i32
    %c0_i32_1 = arith.constant 0 : i32
    return %c0_i32, %c0_i32_0 : i32, i32
  }
  func.func @transform_9(%arg0: i32) -> (i32, i32, i32) {
    %c0_i32 = arith.constant 0 : i32
    %c0_i32_0 = arith.constant 0 : i32
    %c0_i32_1 = arith.constant 0 : i32
    %c0_i32_2 = arith.constant 0 : i32
    return %c0_i32, %c0_i32_0, %c0_i32_1 : i32, i32, i32
  }
}

</mosaic_0001>

<llo_original>
// kernel: tpu_custom_call.1
$region0: #{tpu_custom_call.1}
  #allocation0 [shape = 'u32[]', space=smem, size = 0x4, offset = 0x4, fixed_abs, tag = 'smem constant byte address 0x4 - core index']
  #allocation1 [shape = 'u32[72,128]{1,0:T(1,128)}', space=vmem, size = 0x9000, scoped, tag = 'internal scratch']
  #allocation2 [shape = 'f32[140,32]{1,0:T(8,128)}', space=vmem, size = 0x12000, scoped, tag = 'scratch operand']
  #allocation3 [shape = 'f32[134,256]{1,0:T(8,128)}', space=vmem, size = 0x22000, scoped, tag = 'scratch operand']
  #allocation4 [shape = 'f32[134,32]{1,0:T(8,128)}', space=vmem, size = 0x11000, scoped, tag = 'scratch operand']
  #allocation5 [shape = 'f32[2,32]{1,0:T(2,128)}', space=vmem, size = 0x400, scoped, tag = 'scratch operand']
  %s0 = inlined_call_operand.vmem [shape: f32[2,64,32], index: 0, kind: input, shape index: {}]
  %s1 = inlined_call_operand.vmem [shape: bf16[256,32], index: 1, kind: input, shape index: {}]
  %s2 = inlined_call_operand.vmem [shape: f32[1,32], index: 2, kind: input, shape index: {}]
  %s3 = inlined_call_operand.vmem [shape: f32[1,32], index: 3, kind: input, shape index: {}]
  %s4 = inlined_call_operand.vmem [shape: bf16[256,32], index: 4, kind: input, shape index: {}]
  %s5 = inlined_call_operand.vmem [shape: f32[1,32], index: 5, kind: input, shape index: {}]
  %s6 = inlined_call_operand.vmem [shape: f32[1,32], index: 6, kind: input, shape index: {}]
  %s7 = inlined_call_operand.vmem [shape: f32[32,128], index: 7, kind: input, shape index: {}]
  %s8 = inlined_call_operand.vmem [shape: f32[128,32], index: 8, kind: input, shape index: {}]
  %s9 = inlined_call_operand.vmem [shape: f32[2,64,32], index: 9, kind: output, shape index: {}]
  %s10 = sld [smem:[#allocation0]]
  $region46: #{tpu_custom_call.1} parent=0
    _
  %s12 = ssub.s32 1, %s10
  %s13 = scalar_select 0, %s12, %s10
  // Predicated region
  $region2: #{tpu_custom_call.1} parent=0 // pred_check
    _
  $region3: #{tpu_custom_call.1} parent=0 // pred_check_branch
    %15 = sbr.rel (0) target = $region5
  $region4: #{tpu_custom_call.1} parent=0 // pred_region
    _
  $region5: #{tpu_custom_call.1} parent=0 // pred_fallthru
    _
  // Predicated region
  $region6: #{tpu_custom_call.1} parent=0 // pred_check
    _
  $region7: #{tpu_custom_call.1} parent=0 // pred_check_branch
    %17 = sbr.rel (0) target = $region9
  $region8: #{tpu_custom_call.1} parent=0 // pred_region
    _
  $region9: #{tpu_custom_call.1} parent=0 // pred_fallthru
    _
  // Predicated region
  $region10: #{tpu_custom_call.1} parent=0 // pred_check
    _
  $region11: #{tpu_custom_call.1} parent=0 // pred_check_branch
    %19 = sbr.rel (0) target = $region13
  $region12: #{tpu_custom_call.1} parent=0 // pred_region
    _
  $region13: #{tpu_custom_call.1} parent=0 // pred_fallthru
    _
  // Predicated region
  $region14: #{tpu_custom_call.1} parent=0 // pred_check
    _
  $region15: #{tpu_custom_call.1} parent=0 // pred_check_branch
    %21 = sbr.rel (0) target = $region17
  $region16: #{tpu_custom_call.1} parent=0 // pred_region
    _
  $region17: #{tpu_custom_call.1} parent=0 // pred_fallthru
    _
  // Predicated region
  $region18: #{tpu_custom_call.1} parent=0 // pred_check
    _
  $region19: #{tpu_custom_call.1} parent=0 // pred_check_branch
    %23 = sbr.rel (0) target = $region21
  $region20: #{tpu_custom_call.1} parent=0 // pred_region
    _
  $region21: #{tpu_custom_call.1} parent=0 // pred_fallthru
    _
  // Predicated region
  $region22: #{tpu_custom_call.1} parent=0 // pred_check
    _
  $region23: #{tpu_custom_call.1} parent=0 // pred_check_branch
    %25 = sbr.rel (0) target = $region25
  $region24: #{tpu_custom_call.1} parent=0 // pred_region
    _
  $region25: #{tpu_custom_call.1} parent=0 // pred_fallthru
    _
  // Predicated region
  $region26: #{tpu_custom_call.1} parent=0 // pred_check
    _
  $region27: #{tpu_custom_call.1} parent=0 // pred_check_branch
    %27 = sbr.rel (0) target = $region29
  $region28: #{tpu_custom_call.1} parent=0 // pred_region
    _
  $region29: #{tpu_custom_call.1} parent=0 // pred_fallthru
    _
  // Predicated region
  $region30: #{tpu_custom_call.1} parent=0 // pred_check
    _
  $region31: #{tpu_custom_call.1} parent=0 // pred_check_branch
    %29 = sbr.rel (0) target = $region33
  $region32: #{tpu_custom_call.1} parent=0 // pred_region
    _
  $region33: #{tpu_custom_call.1} parent=0 // pred_fallthru
    _
  // Predicated region
  $region34: #{tpu_custom_call.1} parent=0 // pred_check
    _
  $region35: #{tpu_custom_call.1} parent=0 // pred_check_branch
    %31 = sbr.rel (0) target = $region37
  $region36: #{tpu_custom_call.1} parent=0 // pred_region
    _
  $region37: #{tpu_custom_call.1} parent=0 // pred_fallthru
    _
  %vm32 = vcmask 261120
  %33 = vst.msk [vmem:[#allocation2] sm:$0xff] %vm32, 0.0
  %34 = vst.msk [vmem:[#allocation2 + $0x8] sm:$0xff] %vm32, 0.0
  %35 = vst.msk [vmem:[#allocation2 + $0x10] sm:$0xff] %vm32, 0.0
  %36 = vst.msk [vmem:[#allocation2 + $0x18] sm:$0xff] %vm32, 0.0
  %37 = vst.msk [vmem:[#allocation2 + $0x20] sm:$0xff] %vm32, 0.0
  %38 = vst.msk [vmem:[#allocation2 + $0x28] sm:$0xff] %vm32, 0.0
  %39 = vst.msk [vmem:[#allocation2 + $0x30] sm:$0xff] %vm32, 0.0
  %40 = vst.msk [vmem:[#allocation2 + $0x38] sm:$0xff] %vm32, 0.0
  %41 = vst.msk [vmem:[#allocation2 + $0x40] sm:$0xff] %vm32, 0.0
  %42 = vst.msk [vmem:[#allocation2 + $0x48] sm:$0xff] %vm32, 0.0
  %43 = vst.msk [vmem:[#allocation2 + $0x50] sm:$0xff] %vm32, 0.0
  %44 = vst.msk [vmem:[#allocation2 + $0x58] sm:$0xff] %vm32, 0.0
  %45 = vst.msk [vmem:[#allocation2 + $0x60] sm:$0xff] %vm32, 0.0
  %46 = vst.msk [vmem:[#allocation2 + $0x68] sm:$0xff] %vm32, 0.0
  %47 = vst.msk [vmem:[#allocation2 + $0x70] sm:$0xff] %vm32, 0.0
  %48 = vst.msk [vmem:[#allocation2 + $0x78] sm:$0xff] %vm32, 0.0
  %49 = vst.msk [vmem:[#allocation2 + $0x80] sm:$0xff] %vm32, 0.0
  %vm50 = vcmask 257024
  %51 = vst.msk [vmem:[#allocation2 + $0x88] sm:$0xf] %vm50, 0.0
  %vm52 = vcmask 1048320
  %53 = vst.msk [vmem:[#allocation3 + $0x8] sm:$0xff] %vm52, 0.0
  %54 = vst.msk [vmem:[#allocation3 + $0x18] sm:$0xff] %vm52, 0.0
  %55 = vst.msk [vmem:[#allocation3 + $0x28] sm:$0xff] %vm52, 0.0
  %56 = vst.msk [vmem:[#allocation3 + $0x38] sm:$0xff] %vm52, 0.0
  %57 = vst.msk [vmem:[#allocation3 + $0x48] sm:$0xff] %vm52, 0.0
  %58 = vst.msk [vmem:[#allocation3 + $0x58] sm:$0xff] %vm52, 0.0
  %59 = vst.msk [vmem:[#allocation3 + $0x68] sm:$0xff] %vm52, 0.0
  %60 = vst.msk [vmem:[#allocation3 + $0x78] sm:$0xff] %vm52, 0.0
  %61 = vst.msk [vmem:[#allocation3 + $0x88] sm:$0xff] %vm52, 0.0
  %62 = vst.msk [vmem:[#allocation3 + $0x98] sm:$0xff] %vm52, 0.0
  %63 = vst.msk [vmem:[#allocation3 + $0xa8] sm:$0xff] %vm52, 0.0
  %64 = vst.msk [vmem:[#allocation3 + $0xb8] sm:$0xff] %vm52, 0.0
  %65 = vst.msk [vmem:[#allocation3 + $0xc8] sm:$0xff] %vm52, 0.0
  %66 = vst.msk [vmem:[#allocation3 + $0xd8] sm:$0xff] %vm52, 0.0
  %67 = vst.msk [vmem:[#allocation3 + $0xe8] sm:$0xff] %vm52, 0.0
  %68 = vst.msk [vmem:[#allocation3 + $0xf8] sm:$0xff] %vm52, 0.0
  %vm69 = vcmask 1046272
  %70 = vst.msk [vmem:[#allocation3 + $0x108] sm:$0x3f] %vm69, 0.0
  %v71 = vld [vmem:[%s0] sm:$0xff]
  %v72 = vld [vmem:[%s0 + $0x8] sm:$0xff]
  %v73 = vld [vmem:[%s0 + $0x10] sm:$0xff]
  %v74 = vld [vmem:[%s0 + $0x18] sm:$0xff]
  %v75 = vld [vmem:[%s0 + $0x20] sm:$0xff]
  %v76 = vld [vmem:[%s0 + $0x28] sm:$0xff]
  %v77 = vld [vmem:[%s0 + $0x30] sm:$0xff]
  %v78 = vld [vmem:[%s0 + $0x38] sm:$0xff]
  %79 = vst.msk [vmem:[#allocation2 + $0x3] sm:$0xff] %vm32, %v71
  %80 = vst.msk [vmem:[#allocation2 + $0xb] sm:$0xff] %vm32, %v72
  %81 = vst.msk [vmem:[#allocation2 + $0x13] sm:$0xff] %vm32, %v73
  %82 = vst.msk [vmem:[#allocation2 + $0x1b] sm:$0xff] %vm32, %v74
  %83 = vst.msk [vmem:[#allocation2 + $0x23] sm:$0xff] %vm32, %v75
  %84 = vst.msk [vmem:[#allocation2 + $0x2b] sm:$0xff] %vm32, %v76
  %85 = vst.msk [vmem:[#allocation2 + $0x33] sm:$0xff] %vm32, %v77
  %86 = vst.msk [vmem:[#allocation2 + $0x3b] sm:$0xff] %vm32, %v78
  %s87 = scalar_lea.vmem %s0, 64
  %v88 = vld [vmem:[%s87] sm:$0xff]
  %v89 = vld [vmem:[%s87 + $0x8] sm:$0xff]
  %v90 = vld [vmem:[%s87 + $0x10] sm:$0xff]
  %v91 = vld [vmem:[%s87 + $0x18] sm:$0xff]
  %v92 = vld [vmem:[%s87 + $0x20] sm:$0xff]
  %v93 = vld [vmem:[%s87 + $0x28] sm:$0xff]
  %v94 = vld [vmem:[%s87 + $0x30] sm:$0xff]
  %v95 = vld [vmem:[%s87 + $0x38] sm:$0xff]
  %96 = vst.msk [vmem:[#allocation2 + $0x49] sm:$0xff] %vm32, %v88
  %97 = vst.msk [vmem:[#allocation2 + $0x51] sm:$0xff] %vm32, %v89
  %98 = vst.msk [vmem:[#allocation2 + $0x59] sm:$0xff] %vm32, %v90
  %99 = vst.msk [vmem:[#allocation2 + $0x61] sm:$0xff] %vm32, %v91
  %100 = vst.msk [vmem:[#allocation2 + $0x69] sm:$0xff] %vm32, %v92
  %101 = vst.msk [vmem:[#allocation2 + $0x71] sm:$0xff] %vm32, %v93
  %102 = vst.msk [vmem:[#allocation2 + $0x79] sm:$0xff] %vm32, %v94
  %103 = vst.msk [vmem:[#allocation2 + $0x81] sm:$0xff] %vm32, %v95
  %v104 = vld [vmem:[#allocation2] sm:$0xff]
  %v105 = vld [vmem:[#allocation2 + $0x8] sm:$0xff]
  %v106 = vld [vmem:[#allocation2 + $0x10] sm:$0xff]
  %v107 = vld [vmem:[#allocation2 + $0x18] sm:$0xff]
  %v108 = vld [vmem:[#allocation2 + $0x20] sm:$0xff]
  %v109 = vld [vmem:[#allocation2 + $0x28] sm:$0xff]
  %v110 = vld [vmem:[#allocation2 + $0x30] sm:$0xff]
  %v111 = vld [vmem:[#allocation2 + $0x38] sm:$0xff]
  %v112 = vld [vmem:[#allocation2 + $0x40] sm:$0xff]
  %v113 = vld [vmem:[#allocation2 + $0x48] sm:$0xff]
  %v114 = vld [vmem:[#allocation2 + $0x50] sm:$0xff]
  %v115 = vld [vmem:[#allocation2 + $0x58] sm:$0xff]
  %v116 = vld [vmem:[#allocation2 + $0x60] sm:$0xff]
  %v117 = vld [vmem:[#allocation2 + $0x68] sm:$0xff]
  %v118 = vld [vmem:[#allocation2 + $0x70] sm:$0xff]
  %v119 = vld [vmem:[#allocation2 + $0x78] sm:$0xff]
  %v120 = vld [vmem:[#allocation2 + $0x80] sm:$0x3f]
  %121 = vst.msk [vmem:[#allocation3] sm:$0xff] %vm32, %v104
  %122 = vst.msk [vmem:[#allocation3 + $0x10] sm:$0xff] %vm32, %v105
  %123 = vst.msk [vmem:[#allocation3 + $0x20] sm:$0xff] %vm32, %v106
  %124 = vst.msk [vmem:[#allocation3 + $0x30] sm:$0xff] %vm32, %v107
  %125 = vst.msk [vmem:[#allocation3 + $0x40] sm:$0xff] %vm32, %v108
  %126 = vst.msk [vmem:[#allocation3 + $0x50] sm:$0xff] %vm32, %v109
  %127 = vst.msk [vmem:[#allocation3 + $0x60] sm:$0xff] %vm32, %v110
  %128 = vst.msk [vmem:[#allocation3 + $0x70] sm:$0xff] %vm32, %v111
  %129 = vst.msk [vmem:[#allocation3 + $0x80] sm:$0xff] %vm32, %v112
  %130 = vst.msk [vmem:[#allocation3 + $0x90] sm:$0xff] %vm32, %v113
  %131 = vst.msk [vmem:[#allocation3 + $0xa0] sm:$0xff] %vm32, %v114
  %132 = vst.msk [vmem:[#allocation3 + $0xb0] sm:$0xff] %vm32, %v115
  %133 = vst.msk [vmem:[#allocation3 + $0xc0] sm:$0xff] %vm32, %v116
  %134 = vst.msk [vmem:[#allocation3 + $0xd0] sm:$0xff] %vm32, %v117
  %135 = vst.msk [vmem:[#allocation3 + $0xe0] sm:$0xff] %vm32, %v118
  %136 = vst.msk [vmem:[#allocation3 + $0xf0] sm:$0xff] %vm32, %v119
  %vm137 = vcmask 259072
  %138 = vst.msk [vmem:[#allocation3 + $0x100] sm:$0x3f] %vm137, %v120
  %v139 = vld [vmem:[#allocation2 + $0x1] sm:$0xff]
  %v140 = vld [vmem:[#allocation2 + $0x9] sm:$0xff]
  %v141 = vld [vmem:[#allocation2 + $0x11] sm:$0xff]
  %v142 = vld [vmem:[#allocation2 + $0x19] sm:$0xff]
  %v143 = vld [vmem:[#allocation2 + $0x21] sm:$0xff]
  %v144 = vld [vmem:[#allocation2 + $0x29] sm:$0xff]
  %v145 = vld [vmem:[#allocation2 + $0x31] sm:$0xff]
  %v146 = vld [vmem:[#allocation2 + $0x39] sm:$0xff]
  %v147 = vld [vmem:[#allocation2 + $0x41] sm:$0xff]
  %v148 = vld [vmem:[#allocation2 + $0x49] sm:$0xff]
  %v149 = vld [vmem:[#allocation2 + $0x51] sm:$0xff]
  %v150 = vld [vmem:[#allocation2 + $0x59] sm:$0xff]
  %v151 = vld [vmem:[#allocation2 + $0x61] sm:$0xff]
  %v152 = vld [vmem:[#allocation2 + $0x69] sm:$0xff]
  %v153 = vld [vmem:[#allocation2 + $0x71] sm:$0xff]
  %v154 = vld [vmem:[#allocation2 + $0x79] sm:$0xff]
  %v155 = vld [vmem:[#allocation2 + $0x81] sm:$0x3f]
  %173 = vrot.lane.b32.xlu0 %v139, 32
  %v174 = vpop.permute.xlu0 %173
  %175 = vrot.lane.b32.xlu0 %v140, 32
  %v176 = vpop.permute.xlu0 %175
  %177 = vrot.lane.b32.xlu0 %v141, 32
  %v178 = vpop.permute.xlu0 %177
  %179 = vrot.lane.b32.xlu0 %v142, 32
  %v180 = vpop.permute.xlu0 %179
  %181 = vrot.lane.b32.xlu0 %v143, 32
  %v182 = vpop.permute.xlu0 %181
  %183 = vrot.lane.b32.xlu0 %v144, 32
  %v184 = vpop.permute.xlu0 %183
  %185 = vrot.lane.b32.xlu0 %v145, 32
  %v186 = vpop.permute.xlu0 %185
  %187 = vrot.lane.b32.xlu0 %v146, 32
  %v188 = vpop.permute.xlu0 %187
  %189 = vrot.lane.b32.xlu0 %v147, 32
  %v190 = vpop.permute.xlu0 %189
  %191 = vrot.lane.b32.xlu0 %v148, 32
  %v192 = vpop.permute.xlu0 %191
  %193 = vrot.lane.b32.xlu0 %v149, 32
  %v194 = vpop.permute.xlu0 %193
  %195 = vrot.lane.b32.xlu0 %v150, 32
  %v196 = vpop.permute.xlu0 %195
  %197 = vrot.lane.b32.xlu0 %v151, 32
  %v198 = vpop.permute.xlu0 %197
  %199 = vrot.lane.b32.xlu0 %v152, 32
  %v200 = vpop.permute.xlu0 %199
  %201 = vrot.lane.b32.xlu0 %v153, 32
  %v202 = vpop.permute.xlu0 %201
  %203 = vrot.lane.b32.xlu0 %v154, 32
  %v204 = vpop.permute.xlu0 %203
  %205 = vrot.lane.b32.xlu0 %v155, 32
  %v206 = vpop.permute.xlu0 %205
  %vm224 = vcmask 523520
  %225 = vst.msk [vmem:[#allocation3] sm:$0xff] %vm224, %v174
  %226 = vst.msk [vmem:[#allocation3 + $0x10] sm:$0xff] %vm224, %v176
  %227 = vst.msk [vmem:[#allocation3 + $0x20] sm:$0xff] %vm224, %v178
  %228 = vst.msk [vmem:[#allocation3 + $0x30] sm:$0xff] %vm224, %v180
  %229 = vst.msk [vmem:[#allocation3 + $0x40] sm:$0xff] %vm224, %v182
  %230 = vst.msk [vmem:[#allocation3 + $0x50] sm:$0xff] %vm224, %v184
  %231 = vst.msk [vmem:[#allocation3 + $0x60] sm:$0xff] %vm224, %v186
  %232 = vst.msk [vmem:[#allocation3 + $0x70] sm:$0xff] %vm224, %v188
  %233 = vst.msk [vmem:[#allocation3 + $0x80] sm:$0xff] %vm224, %v190
  %234 = vst.msk [vmem:[#allocation3 + $0x90] sm:$0xff] %vm224, %v192
  %235 = vst.msk [vmem:[#allocation3 + $0xa0] sm:$0xff] %vm224, %v194
  %236 = vst.msk [vmem:[#allocation3 + $0xb0] sm:$0xff] %vm224, %v196
  %237 = vst.msk [vmem:[#allocation3 + $0xc0] sm:$0xff] %vm224, %v198
  %238 = vst.msk [vmem:[#allocation3 + $0xd0] sm:$0xff] %vm224, %v200
  %239 = vst.msk [vmem:[#allocation3 + $0xe0] sm:$0xff] %vm224, %v202
  %240 = vst.msk [vmem:[#allocation3 + $0xf0] sm:$0xff] %vm224, %v204
  %vm241 = vcmask 521472
  %242 = vst.msk [vmem:[#allocation3 + $0x100] sm:$0x3f] %vm241, %v206
  %v243 = vld [vmem:[#allocation2 + $0x2] sm:$0xff]
  %v244 = vld [vmem:[#allocation2 + $0xa] sm:$0xff]
  %v245 = vld [vmem:[#allocation2 + $0x12] sm:$0xff]
  %v246 = vld [vmem:[#allocation2 + $0x1a] sm:$0xff]
  %v247 = vld [vmem:[#allocation2 + $0x22] sm:$0xff]
  %v248 = vld [vmem:[#allocation2 + $0x2a] sm:$0xff]
  %v249 = vld [vmem:[#allocation2 + $0x32] sm:$0xff]
  %v250 = vld [vmem:[#allocation2 + $0x3a] sm:$0xff]
  %v251 = vld [vmem:[#allocation2 + $0x42] sm:$0xff]
  %v252 = vld [vmem:[#allocation2 + $0x4a] sm:$0xff]
  %v253 = vld [vmem:[#allocation2 + $0x52] sm:$0xff]
  %v254 = vld [vmem:[#allocation2 + $0x5a] sm:$0xff]
  %v255 = vld [vmem:[#allocation2 + $0x62] sm:$0xff]
  %v256 = vld [vmem:[#allocation2 + $0x6a] sm:$0xff]
  %v257 = vld [vmem:[#allocation2 + $0x72] sm:$0xff]
  %v258 = vld [vmem:[#allocation2 + $0x7a] sm:$0xff]
  %v259 = vld [vmem:[#allocation2 + $0x82] sm:$0x3f]
  %277 = vrot.lane.b32.xlu0 %v243, 64
  %v278 = vpop.permute.xlu0 %277
  %279 = vrot.lane.b32.xlu0 %v244, 64
  %v280 = vpop.permute.xlu0 %279
  %281 = vrot.lane.b32.xlu0 %v245, 64
  %v282 = vpop.permute.xlu0 %281
  %283 = vrot.lane.b32.xlu0 %v246, 64
  %v284 = vpop.permute.xlu0 %283
  %285 = vrot.lane.b32.xlu0 %v247, 64
  %v286 = vpop.permute.xlu0 %285
  %287 = vrot.lane.b32.xlu0 %v248, 64
  %v288 = vpop.permute.xlu0 %287
  %289 = vrot.lane.b32.xlu0 %v249, 64
  %v290 = vpop.permute.xlu0 %289
  %291 = vrot.lane.b32.xlu0 %v250, 64
  %v292 = vpop.permute.xlu0 %291
  %293 = vrot.lane.b32.xlu0 %v251, 64
  %v294 = vpop.permute.xlu0 %293
  %295 = vrot.lane.b32.xlu0 %v252, 64
  %v296 = vpop.permute.xlu0 %295
  %297 = vrot.lane.b32.xlu0 %v253, 64
  %v298 = vpop.permute.xlu0 %297
  %299 = vrot.lane.b32.xlu0 %v254, 64
  %v300 = vpop.permute.xlu0 %299
  %301 = vrot.lane.b32.xlu0 %v255, 64
  %v302 = vpop.permute.xlu0 %301
  %303 = vrot.lane.b32.xlu0 %v256, 64
  %v304 = vpop.permute.xlu0 %303
  %305 = vrot.lane.b32.xlu0 %v257, 64
  %v306 = vpop.permute.xlu0 %305
  %307 = vrot.lane.b32.xlu0 %v258, 64
  %v308 = vpop.permute.xlu0 %307
  %309 = vrot.lane.b32.xlu0 %v259, 64
  %v310 = vpop.permute.xlu0 %309
  %vm328 = vcmask 785920
  %329 = vst.msk [vmem:[#allocation3] sm:$0xff] %vm328, %v278
  %330 = vst.msk [vmem:[#allocation3 + $0x10] sm:$0xff] %vm328, %v280
  %331 = vst.msk [vmem:[#allocation3 + $0x20] sm:$0xff] %vm328, %v282
  %332 = vst.msk [vmem:[#allocation3 + $0x30] sm:$0xff] %vm328, %v284
  %333 = vst.msk [vmem:[#allocation3 + $0x40] sm:$0xff] %vm328, %v286
  %334 = vst.msk [vmem:[#allocation3 + $0x50] sm:$0xff] %vm328, %v288
  %335 = vst.msk [vmem:[#allocation3 + $0x60] sm:$0xff] %vm328, %v290
  %336 = vst.msk [vmem:[#allocation3 + $0x70] sm:$0xff] %vm328, %v292
  %337 = vst.msk [vmem:[#allocation3 + $0x80] sm:$0xff] %vm328, %v294
  %338 = vst.msk [vmem:[#allocation3 + $0x90] sm:$0xff] %vm328, %v296
  %339 = vst.msk [vmem:[#allocation3 + $0xa0] sm:$0xff] %vm328, %v298
  %340 = vst.msk [vmem:[#allocation3 + $0xb0] sm:$0xff] %vm328, %v300
  %341 = vst.msk [vmem:[#allocation3 + $0xc0] sm:$0xff] %vm328, %v302
  %342 = vst.msk [vmem:[#allocation3 + $0xd0] sm:$0xff] %vm328, %v304
  %343 = vst.msk [vmem:[#allocation3 + $0xe0] sm:$0xff] %vm328, %v306
  %344 = vst.msk [vmem:[#allocation3 + $0xf0] sm:$0xff] %vm328, %v308
  %vm345 = vcmask 783872
  %346 = vst.msk [vmem:[#allocation3 + $0x100] sm:$0x3f] %vm345, %v310
  %v347 = vld [vmem:[#allocation2 + $0x3] sm:$0xff]
  %v348 = vld [vmem:[#allocation2 + $0xb] sm:$0xff]
  %v349 = vld [vmem:[#allocation2 + $0x13] sm:$0xff]
  %v350 = vld [vmem:[#allocation2 + $0x1b] sm:$0xff]
  %v351 = vld [vmem:[#allocation2 + $0x23] sm:$0xff]
  %v352 = vld [vmem:[#allocation2 + $0x2b] sm:$0xff]
  %v353 = vld [vmem:[#allocation2 + $0x33] sm:$0xff]
  %v354 = vld [vmem:[#allocation2 + $0x3b] sm:$0xff]
  %v355 = vld [vmem:[#allocation2 + $0x43] sm:$0xff]
  %v356 = vld [vmem:[#allocation2 + $0x4b] sm:$0xff]
  %v357 = vld [vmem:[#allocation2 + $0x53] sm:$0xff]
  %v358 = vld [vmem:[#allocation2 + $0x5b] sm:$0xff]
  %v359 = vld [vmem:[#allocation2 + $0x63] sm:$0xff]
  %v360 = vld [vmem:[#allocation2 + $0x6b] sm:$0xff]
  %v361 = vld [vmem:[#allocation2 + $0x73] sm:$0xff]
  %v362 = vld [vmem:[#allocation2 + $0x7b] sm:$0xff]
  %v363 = vld [vmem:[#allocation2 + $0x83] sm:$0x3f]
  %381 = vrot.lane.b32.xlu0 %v347, 96
  %v382 = vpop.permute.xlu0 %381
  %383 = vrot.lane.b32.xlu0 %v348, 96
  %v384 = vpop.permute.xlu0 %383
  %385 = vrot.lane.b32.xlu0 %v349, 96
  %v386 = vpop.permute.xlu0 %385
  %387 = vrot.lane.b32.xlu0 %v350, 96
  %v388 = vpop.permute.xlu0 %387
  %389 = vrot.lane.b32.xlu0 %v351, 96
  %v390 = vpop.permute.xlu0 %389
  %391 = vrot.lane.b32.xlu0 %v352, 96
  %v392 = vpop.permute.xlu0 %391
  %393 = vrot.lane.b32.xlu0 %v353, 96
  %v394 = vpop.permute.xlu0 %393
  %395 = vrot.lane.b32.xlu0 %v354, 96
  %v396 = vpop.permute.xlu0 %395
  %397 = vrot.lane.b32.xlu0 %v355, 96
  %v398 = vpop.permute.xlu0 %397
  %399 = vrot.lane.b32.xlu0 %v356, 96
  %v400 = vpop.permute.xlu0 %399
  %401 = vrot.lane.b32.xlu0 %v357, 96
  %v402 = vpop.permute.xlu0 %401
  %403 = vrot.lane.b32.xlu0 %v358, 96
  %v404 = vpop.permute.xlu0 %403
  %405 = vrot.lane.b32.xlu0 %v359, 96
  %v406 = vpop.permute.xlu0 %405
  %407 = vrot.lane.b32.xlu0 %v360, 96
  %v408 = vpop.permute.xlu0 %407
  %409 = vrot.lane.b32.xlu0 %v361, 96
  %v410 = vpop.permute.xlu0 %409
  %411 = vrot.lane.b32.xlu0 %v362, 96
  %v412 = vpop.permute.xlu0 %411
  %413 = vrot.lane.b32.xlu0 %v363, 96
  %v414 = vpop.permute.xlu0 %413
  %432 = vst.msk [vmem:[#allocation3] sm:$0xff] %vm52, %v382
  %433 = vst.msk [vmem:[#allocation3 + $0x10] sm:$0xff] %vm52, %v384
  %434 = vst.msk [vmem:[#allocation3 + $0x20] sm:$0xff] %vm52, %v386
  %435 = vst.msk [vmem:[#allocation3 + $0x30] sm:$0xff] %vm52, %v388
  %436 = vst.msk [vmem:[#allocation3 + $0x40] sm:$0xff] %vm52, %v390
  %437 = vst.msk [vmem:[#allocation3 + $0x50] sm:$0xff] %vm52, %v392
  %438 = vst.msk [vmem:[#allocation3 + $0x60] sm:$0xff] %vm52, %v394
  %439 = vst.msk [vmem:[#allocation3 + $0x70] sm:$0xff] %vm52, %v396
  %440 = vst.msk [vmem:[#allocation3 + $0x80] sm:$0xff] %vm52, %v398
  %441 = vst.msk [vmem:[#allocation3 + $0x90] sm:$0xff] %vm52, %v400
  %442 = vst.msk [vmem:[#allocation3 + $0xa0] sm:$0xff] %vm52, %v402
  %443 = vst.msk [vmem:[#allocation3 + $0xb0] sm:$0xff] %vm52, %v404
  %444 = vst.msk [vmem:[#allocation3 + $0xc0] sm:$0xff] %vm52, %v406
  %445 = vst.msk [vmem:[#allocation3 + $0xd0] sm:$0xff] %vm52, %v408
  %446 = vst.msk [vmem:[#allocation3 + $0xe0] sm:$0xff] %vm52, %v410
  %447 = vst.msk [vmem:[#allocation3 + $0xf0] sm:$0xff] %vm52, %v412
  %448 = vst.msk [vmem:[#allocation3 + $0x100] sm:$0x3f] %vm69, %v414
  %v449 = vld [vmem:[#allocation2 + $0x4] sm:$0xff]
  %v450 = vld [vmem:[#allocation2 + $0xc] sm:$0xff]
  %v451 = vld [vmem:[#allocation2 + $0x14] sm:$0xff]
  %v452 = vld [vmem:[#allocation2 + $0x1c] sm:$0xff]
  %v453 = vld [vmem:[#allocation2 + $0x24] sm:$0xff]
  %v454 = vld [vmem:[#allocation2 + $0x2c] sm:$0xff]
  %v455 = vld [vmem:[#allocation2 + $0x34] sm:$0xff]
  %v456 = vld [vmem:[#allocation2 + $0x3c] sm:$0xff]
  %v457 = vld [vmem:[#allocation2 + $0x44] sm:$0xff]
  %v458 = vld [vmem:[#allocation2 + $0x4c] sm:$0xff]
  %v459 = vld [vmem:[#allocation2 + $0x54] sm:$0xff]
  %v460 = vld [vmem:[#allocation2 + $0x5c] sm:$0xff]
  %v461 = vld [vmem:[#allocation2 + $0x64] sm:$0xff]
  %v462 = vld [vmem:[#allocation2 + $0x6c] sm:$0xff]
  %v463 = vld [vmem:[#allocation2 + $0x74] sm:$0xff]
  %v464 = vld [vmem:[#allocation2 + $0x7c] sm:$0xff]
  %v465 = vld [vmem:[#allocation2 + $0x84] sm:$0x3f]
  %466 = vst.msk [vmem:[#allocation3 + $0x8] sm:$0xff] %vm32, %v449
  %467 = vst.msk [vmem:[#allocation3 + $0x18] sm:$0xff] %vm32, %v450
  %468 = vst.msk [vmem:[#allocation3 + $0x28] sm:$0xff] %vm32, %v451
  %469 = vst.msk [vmem:[#allocation3 + $0x38] sm:$0xff] %vm32, %v452
  %470 = vst.msk [vmem:[#allocation3 + $0x48] sm:$0xff] %vm32, %v453
  %471 = vst.msk [vmem:[#allocation3 + $0x58] sm:$0xff] %vm32, %v454
  %472 = vst.msk [vmem:[#allocation3 + $0x68] sm:$0xff] %vm32, %v455
  %473 = vst.msk [vmem:[#allocation3 + $0x78] sm:$0xff] %vm32, %v456
  %474 = vst.msk [vmem:[#allocation3 + $0x88] sm:$0xff] %vm32, %v457
  %475 = vst.msk [vmem:[#allocation3 + $0x98] sm:$0xff] %vm32, %v458
  %476 = vst.msk [vmem:[#allocation3 + $0xa8] sm:$0xff] %vm32, %v459
  %477 = vst.msk [vmem:[#allocation3 + $0xb8] sm:$0xff] %vm32, %v460
  %478 = vst.msk [vmem:[#allocation3 + $0xc8] sm:$0xff] %vm32, %v461
  %479 = vst.msk [vmem:[#allocation3 + $0xd8] sm:$0xff] %vm32, %v462
  %480 = vst.msk [vmem:[#allocation3 + $0xe8] sm:$0xff] %vm32, %v463
  %481 = vst.msk [vmem:[#allocation3 + $0xf8] sm:$0xff] %vm32, %v464
  %482 = vst.msk [vmem:[#allocation3 + $0x108] sm:$0x3f] %vm137, %v465
  %v483 = vld [vmem:[#allocation2 + $0x5] sm:$0xff]
  %v484 = vld [vmem:[#allocation2 + $0xd] sm:$0xff]
  %v485 = vld [vmem:[#allocation2 + $0x15] sm:$0xff]
  %v486 = vld [vmem:[#allocation2 + $0x1d] sm:$0xff]
  %v487 = vld [vmem:[#allocation2 + $0x25] sm:$0xff]
  %v488 = vld [vmem:[#allocation2 + $0x2d] sm:$0xff]
  %v489 = vld [vmem:[#allocation2 + $0x35] sm:$0xff]
  %v490 = vld [vmem:[#allocation2 + $0x3d] sm:$0xff]
  %v491 = vld [vmem:[#allocation2 + $0x45] sm:$0xff]
  %v492 = vld [vmem:[#allocation2 + $0x4d] sm:$0xff]
  %v493 = vld [vmem:[#allocation2 + $0x55] sm:$0xff]
  %v494 = vld [vmem:[#allocation2 + $0x5d] sm:$0xff]
  %v495 = vld [vmem:[#allocation2 + $0x65] sm:$0xff]
  %v496 = vld [vmem:[#allocation2 + $0x6d] sm:$0xff]
  %v497 = vld [vmem:[#allocation2 + $0x75] sm:$0xff]
  %v498 = vld [vmem:[#allocation2 + $0x7d] sm:$0xff]
  %v499 = vld [vmem:[#allocation2 + $0x85] sm:$0x3f]
  %517 = vrot.lane.b32.xlu0 %v483, 32
  %v518 = vpop.permute.xlu0 %517
  %519 = vrot.lane.b32.xlu0 %v484, 32
  %v520 = vpop.permute.xlu0 %519
  %521 = vrot.lane.b32.xlu0 %v485, 32
  %v522 = vpop.permute.xlu0 %521
  %523 = vrot.lane.b32.xlu0 %v486, 32
  %v524 = vpop.permute.xlu0 %523
  %525 = vrot.lane.b32.xlu0 %v487, 32
  %v526 = vpop.permute.xlu0 %525
  %527 = vrot.lane.b32.xlu0 %v488, 32
  %v528 = vpop.permute.xlu0 %527
  %529 = vrot.lane.b32.xlu0 %v489, 32
  %v530 = vpop.permute.xlu0 %529
  %531 = vrot.lane.b32.xlu0 %v490, 32
  %v532 = vpop.permute.xlu0 %531
  %533 = vrot.lane.b32.xlu0 %v491, 32
  %v534 = vpop.permute.xlu0 %533
  %535 = vrot.lane.b32.xlu0 %v492, 32
  %v536 = vpop.permute.xlu0 %535
  %537 = vrot.lane.b32.xlu0 %v493, 32
  %v538 = vpop.permute.xlu0 %537
  %539 = vrot.lane.b32.xlu0 %v494, 32
  %v540 = vpop.permute.xlu0 %539
  %541 = vrot.lane.b32.xlu0 %v495, 32
  %v542 = vpop.permute.xlu0 %541
  %543 = vrot.lane.b32.xlu0 %v496, 32
  %v544 = vpop.permute.xlu0 %543
  %545 = vrot.lane.b32.xlu0 %v497, 32
  %v546 = vpop.permute.xlu0 %545
  %547 = vrot.lane.b32.xlu0 %v498, 32
  %v548 = vpop.permute.xlu0 %547
  %549 = vrot.lane.b32.xlu0 %v499, 32
  %v550 = vpop.permute.xlu0 %549
  %568 = vst.msk [vmem:[#allocation3 + $0x8] sm:$0xff] %vm224, %v518
  %569 = vst.msk [vmem:[#allocation3 + $0x18] sm:$0xff] %vm224, %v520
  %570 = vst.msk [vmem:[#allocation3 + $0x28] sm:$0xff] %vm224, %v522
  %571 = vst.msk [vmem:[#allocation3 + $0x38] sm:$0xff] %vm224, %v524
  %572 = vst.msk [vmem:[#allocation3 + $0x48] sm:$0xff] %vm224, %v526
  %573 = vst.msk [vmem:[#allocation3 + $0x58] sm:$0xff] %vm224, %v528
  %574 = vst.msk [vmem:[#allocation3 + $0x68] sm:$0xff] %vm224, %v530
  %575 = vst.msk [vmem:[#allocation3 + $0x78] sm:$0xff] %vm224, %v532
  %576 = vst.msk [vmem:[#allocation3 + $0x88] sm:$0xff] %vm224, %v534
  %577 = vst.msk [vmem:[#allocation3 + $0x98] sm:$0xff] %vm224, %v536
  %578 = vst.msk [vmem:[#allocation3 + $0xa8] sm:$0xff] %vm224, %v538
  %579 = vst.msk [vmem:[#allocation3 + $0xb8] sm:$0xff] %vm224, %v540
  %580 = vst.msk [vmem:[#allocation3 + $0xc8] sm:$0xff] %vm224, %v542
  %581 = vst.msk [vmem:[#allocation3 + $0xd8] sm:$0xff] %vm224, %v544
  %582 = vst.msk [vmem:[#allocation3 + $0xe8] sm:$0xff] %vm224, %v546
  %583 = vst.msk [vmem:[#allocation3 + $0xf8] sm:$0xff] %vm224, %v548
  %584 = vst.msk [vmem:[#allocation3 + $0x108] sm:$0x3f] %vm241, %v550
  %v585 = vld [vmem:[#allocation2 + $0x6] sm:$0xff]
  %v586 = vld [vmem:[#allocation2 + $0xe] sm:$0xff]
  %v587 = vld [vmem:[#allocation2 + $0x16] sm:$0xff]
  %v588 = vld [vmem:[#allocation2 + $0x1e] sm:$0xff]
  %v589 = vld [vmem:[#allocation2 + $0x26] sm:$0xff]
  %v590 = vld [vmem:[#allocation2 + $0x2e] sm:$0xff]
  %v591 = vld [vmem:[#allocation2 + $0x36] sm:$0xff]
  %v592 = vld [vmem:[#allocation2 + $0x3e] sm:$0xff]
  %v593 = vld [vmem:[#allocation2 + $0x46] sm:$0xff]
  %v594 = vld [vmem:[#allocation2 + $0x4e] sm:$0xff]
  %v595 = vld [vmem:[#allocation2 + $0x56] sm:$0xff]
  %v596 = vld [vmem:[#allocation2 + $0x5e] sm:$0xff]
  %v597 = vld [vmem:[#allocation2 + $0x66] sm:$0xff]
  %v598 = vld [vmem:[#allocation2 + $0x6e] sm:$0xff]
  %v599 = vld [vmem:[#allocation2 + $0x76] sm:$0xff]
  %v600 = vld [vmem:[#allocation2 + $0x7e] sm:$0xff]
  %v601 = vld [vmem:[#allocation2 + $0x86] sm:$0x3f]
  %619 = vrot.lane.b32.xlu0 %v585, 64
  %v620 = vpop.permute.xlu0 %619
  %621 = vrot.lane.b32.xlu0 %v586, 64
  %v622 = vpop.permute.xlu0 %621
  %623 = vrot.lane.b32.xlu0 %v587, 64
  %v624 = vpop.permute.xlu0 %623
  %625 = vrot.lane.b32.xlu0 %v588, 64
  %v626 = vpop.permute.xlu0 %625
  %627 = vrot.lane.b32.xlu0 %v589, 64
  %v628 = vpop.permute.xlu0 %627
  %629 = vrot.lane.b32.xlu0 %v590, 64
  %v630 = vpop.permute.xlu0 %629
  %631 = vrot.lane.b32.xlu0 %v591, 64
  %v632 = vpop.permute.xlu0 %631
  %633 = vrot.lane.b32.xlu0 %v592, 64
  %v634 = vpop.permute.xlu0 %633
  %635 = vrot.lane.b32.xlu0 %v593, 64
  %v636 = vpop.permute.xlu0 %635
  %637 = vrot.lane.b32.xlu0 %v594, 64
  %v638 = vpop.permute.xlu0 %637
  %639 = vrot.lane.b32.xlu0 %v595, 64
  %v640 = vpop.permute.xlu0 %639
  %641 = vrot.lane.b32.xlu0 %v596, 64
  %v642 = vpop.permute.xlu0 %641
  %643 = vrot.lane.b32.xlu0 %v597, 64
  %v644 = vpop.permute.xlu0 %643
  %645 = vrot.lane.b32.xlu0 %v598, 64
  %v646 = vpop.permute.xlu0 %645
  %647 = vrot.lane.b32.xlu0 %v599, 64
  %v648 = vpop.permute.xlu0 %647
  %649 = vrot.lane.b32.xlu0 %v600, 64
  %v650 = vpop.permute.xlu0 %649
  %651 = vrot.lane.b32.xlu0 %v601, 64
  %v652 = vpop.permute.xlu0 %651
  %670 = vst.msk [vmem:[#allocation3 + $0x8] sm:$0xff] %vm328, %v620
  %671 = vst.msk [vmem:[#allocation3 + $0x18] sm:$0xff] %vm328, %v622
  %672 = vst.msk [vmem:[#allocation3 + $0x28] sm:$0xff] %vm328, %v624
  %673 = vst.msk [vmem:[#allocation3 + $0x38] sm:$0xff] %vm328, %v626
  %674 = vst.msk [vmem:[#allocation3 + $0x48] sm:$0xff] %vm328, %v628
  %675 = vst.msk [vmem:[#allocation3 + $0x58] sm:$0xff] %vm328, %v630
  %676 = vst.msk [vmem:[#allocation3 + $0x68] sm:$0xff] %vm328, %v632
  %677 = vst.msk [vmem:[#allocation3 + $0x78] sm:$0xff] %vm328, %v634
  %678 = vst.msk [vmem:[#allocation3 + $0x88] sm:$0xff] %vm328, %v636
  %679 = vst.msk [vmem:[#allocation3 + $0x98] sm:$0xff] %vm328, %v638
  %680 = vst.msk [vmem:[#allocation3 + $0xa8] sm:$0xff] %vm328, %v640
  %681 = vst.msk [vmem:[#allocation3 + $0xb8] sm:$0xff] %vm328, %v642
  %682 = vst.msk [vmem:[#allocation3 + $0xc8] sm:$0xff] %vm328, %v644
  %683 = vst.msk [vmem:[#allocation3 + $0xd8] sm:$0xff] %vm328, %v646
  %684 = vst.msk [vmem:[#allocation3 + $0xe8] sm:$0xff] %vm328, %v648
  %685 = vst.msk [vmem:[#allocation3 + $0xf8] sm:$0xff] %vm328, %v650
  %686 = vst.msk [vmem:[#allocation3 + $0x108] sm:$0x3f] %vm345, %v652
  %v687 = vld [vmem:[#allocation3] sm:$0xff]
  %v688 = vld [vmem:[#allocation3 + $0x8] sm:$0xff]
  %v689 = vld [vmem:[#allocation3 + $0x10] sm:$0xff]
  %v690 = vld [vmem:[#allocation3 + $0x18] sm:$0xff]
  %v691 = vld [vmem:[#allocation3 + $0x20] sm:$0xff]
  %v692 = vld [vmem:[#allocation3 + $0x28] sm:$0xff]
  %v693 = vld [vmem:[#allocation3 + $0x30] sm:$0xff]
  %v694 = vld [vmem:[#allocation3 + $0x38] sm:$0xff]
  %v695 = vld [vmem:[#allocation3 + $0x40] sm:$0xff]
  %v696 = vld [vmem:[#allocation3 + $0x48] sm:$0xff]
  %v697 = vld [vmem:[#allocation3 + $0x50] sm:$0xff]
  %v698 = vld [vmem:[#allocation3 + $0x58] sm:$0xff]
  %v699 = vld [vmem:[#allocation3 + $0x60] sm:$0xff]
  %v700 = vld [vmem:[#allocation3 + $0x68] sm:$0xff]
  %v701 = vld [vmem:[#allocation3 + $0x70] sm:$0xff]
  %v702 = vld [vmem:[#allocation3 + $0x78] sm:$0xff]
  %v703 = vld [vmem:[#allocation3 + $0x80] sm:$0xff]
  %v704 = vld [vmem:[#allocation3 + $0x88] sm:$0xff]
  %v705 = vld [vmem:[#allocation3 + $0x90] sm:$0xff]
  %v706 = vld [vmem:[#allocation3 + $0x98] sm:$0xff]
  %v707 = vld [vmem:[#allocation3 + $0xa0] sm:$0xff]
  %v708 = vld [vmem:[#allocation3 + $0xa8] sm:$0xff]
  %v709 = vld [vmem:[#allocation3 + $0xb0] sm:$0xff]
  %v710 = vld [vmem:[#allocation3 + $0xb8] sm:$0xff]
  %v711 = vld [vmem:[#allocation3 + $0xc0] sm:$0xff]
  %v712 = vld [vmem:[#allocation3 + $0xc8] sm:$0xff]
  %v713 = vld [vmem:[#allocation3 + $0xd0] sm:$0xff]
  %v714 = vld [vmem:[#allocation3 + $0xd8] sm:$0xff]
  %v715 = vld [vmem:[#allocation3 + $0xe0] sm:$0xff]
  %v716 = vld [vmem:[#allocation3 + $0xe8] sm:$0xff]
  %v717 = vld [vmem:[#allocation3 + $0xf0] sm:$0xff]
  %v718 = vld [vmem:[#allocation3 + $0xf8] sm:$0xff]
  %v719 = vld [vmem:[#allocation3 + $0x100] sm:$0x3f]
  %v720 = vld [vmem:[#allocation3 + $0x108] sm:$0x3f]
  %v721 = vpack.c.bf16 %v689, %v687
  %v722 = vpack.c.bf16 %v690, %v688
  %v723 = vpack.c.bf16 %v693, %v691
  %v724 = vpack.c.bf16 %v694, %v692
  %v725 = vpack.c.bf16 %v697, %v695
  %v726 = vpack.c.bf16 %v698, %v696
  %v727 = vpack.c.bf16 %v701, %v699
  %v728 = vpack.c.bf16 %v702, %v700
  %v729 = vpack.c.bf16 %v705, %v703
  %v730 = vpack.c.bf16 %v706, %v704
  %v731 = vpack.c.bf16 %v709, %v707
  %v732 = vpack.c.bf16 %v710, %v708
  %v733 = vpack.c.bf16 %v713, %v711
  %v734 = vpack.c.bf16 %v714, %v712
  %v735 = vpack.c.bf16 %v717, %v715
  %v736 = vpack.c.bf16 %v718, %v716
  %v737 = vpack.c.bf16 %v719, %v719
  %v738 = vpack.c.bf16 %v720, %v720
  %v739 = vld [vmem:[%s1] sm:$0xf]
  %v740 = vld [vmem:[%s1 + $0x4] sm:$0xf]
  %v741 = vld [vmem:[%s1 + $0x8] sm:$0xf]
  %v742 = vld [vmem:[%s1 + $0xc] sm:$0xf]
  %v743 = vld [vmem:[%s1 + $0x10] sm:$0xf]
  %v744 = vld [vmem:[%s1 + $0x14] sm:$0xf]
  %v745 = vld [vmem:[%s1 + $0x18] sm:$0xf]
  %v746 = vld [vmem:[%s1 + $0x1c] sm:$0xf]
  %v747 = vld [vmem:[%s1 + $0x20] sm:$0xf]
  %v748 = vld [vmem:[%s1 + $0x24] sm:$0xf]
  %v749 = vld [vmem:[%s1 + $0x28] sm:$0xf]
  %v750 = vld [vmem:[%s1 + $0x2c] sm:$0xf]
  %v751 = vld [vmem:[%s1 + $0x30] sm:$0xf]
  %v752 = vld [vmem:[%s1 + $0x34] sm:$0xf]
  %v753 = vld [vmem:[%s1 + $0x38] sm:$0xf]
  %v754 = vld [vmem:[%s1 + $0x3c] sm:$0xf]
  %v755 = vld [vmem:[%s1 + $0x40] sm:$0xf]
  %v756 = vld [vmem:[%s1 + $0x44] sm:$0xf]
  %v757 = vld [vmem:[%s1 + $0x48] sm:$0xf]
  %v758 = vld [vmem:[%s1 + $0x4c] sm:$0xf]
  %v759 = vld [vmem:[%s1 + $0x50] sm:$0xf]
  %v760 = vld [vmem:[%s1 + $0x54] sm:$0xf]
  %v761 = vld [vmem:[%s1 + $0x58] sm:$0xf]
  %v762 = vld [vmem:[%s1 + $0x5c] sm:$0xf]
  %v763 = vld [vmem:[%s1 + $0x60] sm:$0xf]
  %v764 = vld [vmem:[%s1 + $0x64] sm:$0xf]
  %v765 = vld [vmem:[%s1 + $0x68] sm:$0xf]
  %v766 = vld [vmem:[%s1 + $0x6c] sm:$0xf]
  %v767 = vld [vmem:[%s1 + $0x70] sm:$0xf]
  %v768 = vld [vmem:[%s1 + $0x74] sm:$0xf]
  %v769 = vld [vmem:[%s1 + $0x78] sm:$0xf]
  %v770 = vld [vmem:[%s1 + $0x7c] sm:$0xf]
  %v803 = vunpack.c.l.b16 %v739
  %v804 = vunpack.c.l.b16 %v740
  %v805 = vunpack.c.l.b16 %v741
  %v806 = vunpack.c.l.b16 %v742
  %v807 = vunpack.c.l.b16 %v743
  %v808 = vunpack.c.l.b16 %v744
  %v809 = vunpack.c.l.b16 %v745
  %v810 = vunpack.c.l.b16 %v746
  %v811 = vunpack.c.l.b16 %v747
  %v812 = vunpack.c.l.b16 %v748
  %v813 = vunpack.c.l.b16 %v749
  %v814 = vunpack.c.l.b16 %v750
  %v815 = vunpack.c.l.b16 %v751
  %v816 = vunpack.c.l.b16 %v752
  %v817 = vunpack.c.l.b16 %v753
  %v818 = vunpack.c.l.b16 %v754
  %v819 = vunpack.c.l.b16 %v755
  %v820 = vunpack.c.l.b16 %v756
  %v821 = vunpack.c.l.b16 %v757
  %v822 = vunpack.c.l.b16 %v758
  %v823 = vunpack.c.l.b16 %v759
  %v824 = vunpack.c.l.b16 %v760
  %v825 = vunpack.c.l.b16 %v761
  %v826 = vunpack.c.l.b16 %v762
  %v827 = vunpack.c.l.b16 %v763
  %v828 = vunpack.c.l.b16 %v764
  %v829 = vunpack.c.l.b16 %v765
  %v830 = vunpack.c.l.b16 %v766
  %v831 = vunpack.c.l.b16 %v767
  %v832 = vunpack.c.l.b16 %v768
  %v833 = vunpack.c.l.b16 %v769
  %v834 = vunpack.c.l.b16 %v770
  %v835 = vpack.c.b16 %v804, %v803
  %v836 = vpack.c.b16 %v806, %v805
  %v837 = vpack.c.b16 %v808, %v807
  %v838 = vpack.c.b16 %v810, %v809
  %v839 = vpack.c.b16 %v812, %v811
  %v840 = vpack.c.b16 %v814, %v813
  %v841 = vpack.c.b16 %v816, %v815
  %v842 = vpack.c.b16 %v818, %v817
  %v843 = vpack.c.b16 %v820, %v819
  %v844 = vpack.c.b16 %v822, %v821
  %v845 = vpack.c.b16 %v824, %v823
  %v846 = vpack.c.b16 %v826, %v825
  %v847 = vpack.c.b16 %v828, %v827
  %v848 = vpack.c.b16 %v830, %v829
  %v849 = vpack.c.b16 %v832, %v831
  %v850 = vpack.c.b16 %v834, %v833
  %867 = vmatpush.bf16.msra.mxu0 %v842
  %868 = vmatpush.bf16.msra.mxu0 %v841
  %869 = vmatpush.bf16.msra.mxu0 %v840
  %870 = vmatpush.bf16.msra.mxu0 %v839
  %871 = vmatpush.bf16.msra.mxu0 %v838
  %872 = vmatpush.bf16.msra.mxu0 %v837
  %873 = vmatpush.bf16.msra.mxu0 %v836
  %874 = vmatpush.bf16.msra.mxu0 %v835
  %875 = vmatmul.bf16.gmra.mxu0 %v721
  %v876 = vpop.f32.mrf.mxu0
  %v877 = vadd.f32 0.0, %v876
  %v878 = vpop.f32.mrf.mxu0
  %v879 = vadd.f32 0.0, %v878
  %880 = vmatmul.bf16.gmra.mxu0 %v723
  %v881 = vpop.f32.mrf.mxu0
  %v882 = vadd.f32 0.0, %v881
  %v883 = vpop.f32.mrf.mxu0
  %v884 = vadd.f32 0.0, %v883
  %885 = vmatmul.bf16.gmra.mxu0 %v725
  %v886 = vpop.f32.mrf.mxu0
  %v887 = vadd.f32 0.0, %v886
  %v888 = vpop.f32.mrf.mxu0
  %v889 = vadd.f32 0.0, %v888
  %890 = vmatmul.bf16.gmra.mxu0 %v727
  %v891 = vpop.f32.mrf.mxu0
  %v892 = vadd.f32 0.0, %v891
  %v893 = vpop.f32.mrf.mxu0
  %v894 = vadd.f32 0.0, %v893
  %895 = vmatmul.bf16.gmra.mxu0 %v729
  %v896 = vpop.f32.mrf.mxu0
  %v897 = vadd.f32 0.0, %v896
  %v898 = vpop.f32.mrf.mxu0
  %v899 = vadd.f32 0.0, %v898
  %900 = vmatmul.bf16.gmra.mxu0 %v731
  %v901 = vpop.f32.mrf.mxu0
  %v902 = vadd.f32 0.0, %v901
  %v903 = vpop.f32.mrf.mxu0
  %v904 = vadd.f32 0.0, %v903
  %905 = vmatmul.bf16.gmra.mxu0 %v733
  %v906 = vpop.f32.mrf.mxu0
  %v907 = vadd.f32 0.0, %v906
  %v908 = vpop.f32.mrf.mxu0
  %v909 = vadd.f32 0.0, %v908
  %910 = vmatmul.bf16.gmra.mxu0 %v735
  %v911 = vpop.f32.mrf.mxu0
  %v912 = vadd.f32 0.0, %v911
  %v913 = vpop.f32.mrf.mxu0
  %v914 = vadd.f32 0.0, %v913
  %915 = vmatmul.bf16.gmra.mxu0 %v737
  %v916 = vpop.f32.mrf.mxu0
  %v917 = vadd.f32 0.0, %v916
  %v918 = vpop.f32.mrf.mxu0
  %919 = vdwg.mxu0
  %920 = vmatpush.bf16.msra.mxu0 %v850
  %921 = vmatpush.bf16.msra.mxu0 %v849
  %922 = vmatpush.bf16.msra.mxu0 %v848
  %923 = vmatpush.bf16.msra.mxu0 %v847
  %924 = vmatpush.bf16.msra.mxu0 %v846
  %925 = vmatpush.bf16.msra.mxu0 %v845
  %926 = vmatpush.bf16.msra.mxu0 %v844
  %927 = vmatpush.bf16.msra.mxu0 %v843
  %928 = vmatmul.bf16.gmra.mxu0 %v722
  %v929 = vpop.f32.mrf.mxu0
  %v930 = vadd.f32 %v877, %v929
  %v931 = vpop.f32.mrf.mxu0
  %v932 = vadd.f32 %v879, %v931
  %933 = vmatmul.bf16.gmra.mxu0 %v724
  %v934 = vpop.f32.mrf.mxu0
  %v935 = vadd.f32 %v882, %v934
  %v936 = vpop.f32.mrf.mxu0
  %v937 = vadd.f32 %v884, %v936
  %938 = vmatmul.bf16.gmra.mxu0 %v726
  %v939 = vpop.f32.mrf.mxu0
  %v940 = vadd.f32 %v887, %v939
  %v941 = vpop.f32.mrf.mxu0
  %v942 = vadd.f32 %v889, %v941
  %943 = vmatmul.bf16.gmra.mxu0 %v728
  %v944 = vpop.f32.mrf.mxu0
  %v945 = vadd.f32 %v892, %v944
  %v946 = vpop.f32.mrf.mxu0
  %v947 = vadd.f32 %v894, %v946
  %948 = vmatmul.bf16.gmra.mxu0 %v730
  %v949 = vpop.f32.mrf.mxu0
  %v950 = vadd.f32 %v897, %v949
  %v951 = vpop.f32.mrf.mxu0
  %v952 = vadd.f32 %v899, %v951
  %953 = vmatmul.bf16.gmra.mxu0 %v732
  %v954 = vpop.f32.mrf.mxu0
  %v955 = vadd.f32 %v902, %v954
  %v956 = vpop.f32.mrf.mxu0
  %v957 = vadd.f32 %v904, %v956
  %958 = vmatmul.bf16.gmra.mxu0 %v734
  %v959 = vpop.f32.mrf.mxu0
  %v960 = vadd.f32 %v907, %v959
  %v961 = vpop.f32.mrf.mxu0
  %v962 = vadd.f32 %v909, %v961
  %963 = vmatmul.bf16.gmra.mxu0 %v736
  %v964 = vpop.f32.mrf.mxu0
  %v965 = vadd.f32 %v912, %v964
  %v966 = vpop.f32.mrf.mxu0
  %v967 = vadd.f32 %v914, %v966
  %968 = vmatmul.bf16.gmra.mxu0 %v738
  %v969 = vpop.f32.mrf.mxu0
  %v970 = vadd.f32 %v917, %v969
  %v971 = vpop.f32.mrf.mxu0
  %972 = vdwg.mxu0
  %v973 = vld [vmem:[%s2] sm:$0x1]
  %v975 = vperm.slane %v973, 0
  %v977 = vmul.f32 %v930, %v975
  %v978 = vmul.f32 %v932, %v975
  %v979 = vmul.f32 %v935, %v975
  %v980 = vmul.f32 %v937, %v975
  %v981 = vmul.f32 %v940, %v975
  %v982 = vmul.f32 %v942, %v975
  %v983 = vmul.f32 %v945, %v975
  %v984 = vmul.f32 %v947, %v975
  %v985 = vmul.f32 %v950, %v975
  %v986 = vmul.f32 %v952, %v975
  %v987 = vmul.f32 %v955, %v975
  %v988 = vmul.f32 %v957, %v975
  %v989 = vmul.f32 %v960, %v975
  %v990 = vmul.f32 %v962, %v975
  %v991 = vmul.f32 %v965, %v975
  %v992 = vmul.f32 %v967, %v975
  %v993 = vmul.f32 %v970, %v975
  %v994 = vld [vmem:[%s3] sm:$0x1]
  %v996 = vperm.slane %v994, 0
  %v998 = vadd.f32 %v977, %v996
  %v999 = vadd.f32 %v978, %v996
  %v1000 = vadd.f32 %v979, %v996
  %v1001 = vadd.f32 %v980, %v996
  %v1002 = vadd.f32 %v981, %v996
  %v1003 = vadd.f32 %v982, %v996
  %v1004 = vadd.f32 %v983, %v996
  %v1005 = vadd.f32 %v984, %v996
  %v1006 = vadd.f32 %v985, %v996
  %v1007 = vadd.f32 %v986, %v996
  %v1008 = vadd.f32 %v987, %v996
  %v1009 = vadd.f32 %v988, %v996
  %v1010 = vadd.f32 %v989, %v996
  %v1011 = vadd.f32 %v990, %v996
  %v1012 = vadd.f32 %v991, %v996
  %v1013 = vadd.f32 %v992, %v996
  %v1014 = vadd.f32 %v993, %v996
  %v1015 = vmax.f32 %v998, 0.0
  %v1016 = vmax.f32 %v999, 0.0
  %v1017 = vmax.f32 %v1000, 0.0
  %v1018 = vmax.f32 %v1001, 0.0
  %v1019 = vmax.f32 %v1002, 0.0
  %v1020 = vmax.f32 %v1003, 0.0
  %v1021 = vmax.f32 %v1004, 0.0
  %v1022 = vmax.f32 %v1005, 0.0
  %v1023 = vmax.f32 %v1006, 0.0
  %v1024 = vmax.f32 %v1007, 0.0
  %v1025 = vmax.f32 %v1008, 0.0
  %v1026 = vmax.f32 %v1009, 0.0
  %v1027 = vmax.f32 %v1010, 0.0
  %v1028 = vmax.f32 %v1011, 0.0
  %v1029 = vmax.f32 %v1012, 0.0
  %v1030 = vmax.f32 %v1013, 0.0
  %v1031 = vmax.f32 %v1014, 0.0
  %1032 = vst.msk [vmem:[#allocation4] sm:$0xff] %vm32, %v1015
  %1033 = vst.msk [vmem:[#allocation4 + $0x8] sm:$0xff] %vm32, %v1016
  %1034 = vst.msk [vmem:[#allocation4 + $0x10] sm:$0xff] %vm32, %v1017
  %1035 = vst.msk [vmem:[#allocation4 + $0x18] sm:$0xff] %vm32, %v1018
  %1036 = vst.msk [vmem:[#allocation4 + $0x20] sm:$0xff] %vm32, %v1019
  %1037 = vst.msk [vmem:[#allocation4 + $0x28] sm:$0xff] %vm32, %v1020
  %1038 = vst.msk [vmem:[#allocation4 + $0x30] sm:$0xff] %vm32, %v1021
  %1039 = vst.msk [vmem:[#allocation4 + $0x38] sm:$0xff] %vm32, %v1022
  %1040 = vst.msk [vmem:[#allocation4 + $0x40] sm:$0xff] %vm32, %v1023
  %1041 = vst.msk [vmem:[#allocation4 + $0x48] sm:$0xff] %vm32, %v1024
  %1042 = vst.msk [vmem:[#allocation4 + $0x50] sm:$0xff] %vm32, %v1025
  %1043 = vst.msk [vmem:[#allocation4 + $0x58] sm:$0xff] %vm32, %v1026
  %1044 = vst.msk [vmem:[#allocation4 + $0x60] sm:$0xff] %vm32, %v1027
  %1045 = vst.msk [vmem:[#allocation4 + $0x68] sm:$0xff] %vm32, %v1028
  %1046 = vst.msk [vmem:[#allocation4 + $0x70] sm:$0xff] %vm32, %v1029
  %1047 = vst.msk [vmem:[#allocation4 + $0x78] sm:$0xff] %vm32, %v1030
  %1048 = vst.msk [vmem:[#allocation4 + $0x80] sm:$0x3f] %vm137, %v1031
  %v1049 = vld [vmem:[#allocation4] sm:$0xff]
  %v1050 = vld [vmem:[#allocation4 + $0x8] sm:$0xff]
  %v1051 = vld [vmem:[#allocation4 + $0x10] sm:$0xff]
  %v1052 = vld [vmem:[#allocation4 + $0x18] sm:$0xff]
  %v1053 = vld [vmem:[#allocation4 + $0x20] sm:$0xff]
  %v1054 = vld [vmem:[#allocation4 + $0x28] sm:$0xff]
  %v1055 = vld [vmem:[#allocation4 + $0x30] sm:$0xff]
  %v1056 = vld [vmem:[#allocation4 + $0x38] sm:$0xff]
  %1057 = vst.msk [vmem:[#allocation2 + $0x3] sm:$0xff] %vm32, %v1049
  %1058 = vst.msk [vmem:[#allocation2 + $0xb] sm:$0xff] %vm32, %v1050
  %1059 = vst.msk [vmem:[#allocation2 + $0x13] sm:$0xff] %vm32, %v1051
  %1060 = vst.msk [vmem:[#allocation2 + $0x1b] sm:$0xff] %vm32, %v1052
  %1061 = vst.msk [vmem:[#allocation2 + $0x23] sm:$0xff] %vm32, %v1053
  %1062 = vst.msk [vmem:[#allocation2 + $0x2b] sm:$0xff] %vm32, %v1054
  %1063 = vst.msk [vmem:[#allocation2 + $0x33] sm:$0xff] %vm32, %v1055
  %1064 = vst.msk [vmem:[#allocation2 + $0x3b] sm:$0xff] %vm32, %v1056
  %v1065 = vld [vmem:[#allocation4 + $0x46] sm:$0xff]
  %v1066 = vld [vmem:[#allocation4 + $0x4e] sm:$0xff]
  %v1067 = vld [vmem:[#allocation4 + $0x56] sm:$0xff]
  %v1068 = vld [vmem:[#allocation4 + $0x5e] sm:$0xff]
  %v1069 = vld [vmem:[#allocation4 + $0x66] sm:$0xff]
  %v1070 = vld [vmem:[#allocation4 + $0x6e] sm:$0xff]
  %v1071 = vld [vmem:[#allocation4 + $0x76] sm:$0xff]
  %v1072 = vld [vmem:[#allocation4 + $0x7e] sm:$0xff]
  %1073 = vst.msk [vmem:[#allocation2 + $0x49] sm:$0xff] %vm32, %v1065
  %1074 = vst.msk [vmem:[#allocation2 + $0x51] sm:$0xff] %vm32, %v1066
  %1075 = vst.msk [vmem:[#allocation2 + $0x59] sm:$0xff] %vm32, %v1067
  %1076 = vst.msk [vmem:[#allocation2 + $0x61] sm:$0xff] %vm32, %v1068
  %1077 = vst.msk [vmem:[#allocation2 + $0x69] sm:$0xff] %vm32, %v1069
  %1078 = vst.msk [vmem:[#allocation2 + $0x71] sm:$0xff] %vm32, %v1070
  %1079 = vst.msk [vmem:[#allocation2 + $0x79] sm:$0xff] %vm32, %v1071
  %1080 = vst.msk [vmem:[#allocation2 + $0x81] sm:$0xff] %vm32, %v1072
  %v1081 = vld [vmem:[#allocation2] sm:$0xff]
  %v1082 = vld [vmem:[#allocation2 + $0x8] sm:$0xff]
  %v1083 = vld [vmem:[#allocation2 + $0x10] sm:$0xff]
  %v1084 = vld [vmem:[#allocation2 + $0x18] sm:$0xff]
  %v1085 = vld [vmem:[#allocation2 + $0x20] sm:$0xff]
  %v1086 = vld [vmem:[#allocation2 + $0x28] sm:$0xff]
  %v1087 = vld [vmem:[#allocation2 + $0x30] sm:$0xff]
  %v1088 = vld [vmem:[#allocation2 + $0x38] sm:$0xff]
  %v1089 = vld [vmem:[#allocation2 + $0x40] sm:$0xff]
  %v1090 = vld [vmem:[#allocation2 + $0x48] sm:$0xff]
  %v1091 = vld [vmem:[#allocation2 + $0x50] sm:$0xff]
  %v1092 = vld [vmem:[#allocation2 + $0x58] sm:$0xff]
  %v1093 = vld [vmem:[#allocation2 + $0x60] sm:$0xff]
  %v1094 = vld [vmem:[#allocation2 + $0x68] sm:$0xff]
  %v1095 = vld [vmem:[#allocation2 + $0x70] sm:$0xff]
  %v1096 = vld [vmem:[#allocation2 + $0x78] sm:$0xff]
  %v1097 = vld [vmem:[#allocation2 + $0x80] sm:$0x3f]
  %1098 = vst.msk [vmem:[#allocation3] sm:$0xff] %vm32, %v1081
  %1099 = vst.msk [vmem:[#allocation3 + $0x10] sm:$0xff] %vm32, %v1082
  %1100 = vst.msk [vmem:[#allocation3 + $0x20] sm:$0xff] %vm32, %v1083
  %1101 = vst.msk [vmem:[#allocation3 + $0x30] sm:$0xff] %vm32, %v1084
  %1102 = vst.msk [vmem:[#allocation3 + $0x40] sm:$0xff] %vm32, %v1085
  %1103 = vst.msk [vmem:[#allocation3 + $0x50] sm:$0xff] %vm32, %v1086
  %1104 = vst.msk [vmem:[#allocation3 + $0x60] sm:$0xff] %vm32, %v1087
  %1105 = vst.msk [vmem:[#allocation3 + $0x70] sm:$0xff] %vm32, %v1088
  %1106 = vst.msk [vmem:[#allocation3 + $0x80] sm:$0xff] %vm32, %v1089
  %1107 = vst.msk [vmem:[#allocation3 + $0x90] sm:$0xff] %vm32, %v1090
  %1108 = vst.msk [vmem:[#allocation3 + $0xa0] sm:$0xff] %vm32, %v1091
  %1109 = vst.msk [vmem:[#allocation3 + $0xb0] sm:$0xff] %vm32, %v1092
  %1110 = vst.msk [vmem:[#allocation3 + $0xc0] sm:$0xff] %vm32, %v1093
  %1111 = vst.msk [vmem:[#allocation3 + $0xd0] sm:$0xff] %vm32, %v1094
  %1112 = vst.msk [vmem:[#allocation3 + $0xe0] sm:$0xff] %vm32, %v1095
  %1113 = vst.msk [vmem:[#allocation3 + $0xf0] sm:$0xff] %vm32, %v1096
  %1114 = vst.msk [vmem:[#allocation3 + $0x100] sm:$0x3f] %vm137, %v1097
  %v1115 = vld [vmem:[#allocation2 + $0x1] sm:$0xff]
  %v1116 = vld [vmem:[#allocation2 + $0x9] sm:$0xff]
  %v1117 = vld [vmem:[#allocation2 + $0x11] sm:$0xff]
  %v1118 = vld [vmem:[#allocation2 + $0x19] sm:$0xff]
  %v1119 = vld [vmem:[#allocation2 + $0x21] sm:$0xff]
  %v1120 = vld [vmem:[#allocation2 + $0x29] sm:$0xff]
  %v1121 = vld [vmem:[#allocation2 + $0x31] sm:$0xff]
  %v1122 = vld [vmem:[#allocation2 + $0x39] sm:$0xff]
  %v1123 = vld [vmem:[#allocation2 + $0x41] sm:$0xff]
  %v1124 = vld [vmem:[#allocation2 + $0x49] sm:$0xff]
  %v1125 = vld [vmem:[#allocation2 + $0x51] sm:$0xff]
  %v1126 = vld [vmem:[#allocation2 + $0x59] sm:$0xff]
  %v1127 = vld [vmem:[#allocation2 + $0x61] sm:$0xff]
  %v1128 = vld [vmem:[#allocation2 + $0x69] sm:$0xff]
  %v1129 = vld [vmem:[#allocation2 + $0x71] sm:$0xff]
  %v1130 = vld [vmem:[#allocation2 + $0x79] sm:$0xff]
  %v1131 = vld [vmem:[#allocation2 + $0x81] sm:$0x3f]
  %1149 = vrot.lane.b32.xlu0 %v1115, 32
  %v1150 = vpop.permute.xlu0 %1149
  %1151 = vrot.lane.b32.xlu0 %v1116, 32
  %v1152 = vpop.permute.xlu0 %1151
  %1153 = vrot.lane.b32.xlu0 %v1117, 32
  %v1154 = vpop.permute.xlu0 %1153
  %1155 = vrot.lane.b32.xlu0 %v1118, 32
  %v1156 = vpop.permute.xlu0 %1155
  %1157 = vrot.lane.b32.xlu0 %v1119, 32
  %v1158 = vpop.permute.xlu0 %1157
  %1159 = vrot.lane.b32.xlu0 %v1120, 32
  %v1160 = vpop.permute.xlu0 %1159
  %1161 = vrot.lane.b32.xlu0 %v1121, 32
  %v1162 = vpop.permute.xlu0 %1161
  %1163 = vrot.lane.b32.xlu0 %v1122, 32
  %v1164 = vpop.permute.xlu0 %1163
  %1165 = vrot.lane.b32.xlu0 %v1123, 32
  %v1166 = vpop.permute.xlu0 %1165
  %1167 = vrot.lane.b32.xlu0 %v1124, 32
  %v1168 = vpop.permute.xlu0 %1167
  %1169 = vrot.lane.b32.xlu0 %v1125, 32
  %v1170 = vpop.permute.xlu0 %1169
  %1171 = vrot.lane.b32.xlu0 %v1126, 32
  %v1172 = vpop.permute.xlu0 %1171
  %1173 = vrot.lane.b32.xlu0 %v1127, 32
  %v1174 = vpop.permute.xlu0 %1173
  %1175 = vrot.lane.b32.xlu0 %v1128, 32
  %v1176 = vpop.permute.xlu0 %1175
  %1177 = vrot.lane.b32.xlu0 %v1129, 32
  %v1178 = vpop.permute.xlu0 %1177
  %1179 = vrot.lane.b32.xlu0 %v1130, 32
  %v1180 = vpop.permute.xlu0 %1179
  %1181 = vrot.lane.b32.xlu0 %v1131, 32
  %v1182 = vpop.permute.xlu0 %1181
  %1200 = vst.msk [vmem:[#allocation3] sm:$0xff] %vm224, %v1150
  %1201 = vst.msk [vmem:[#allocation3 + $0x10] sm:$0xff] %vm224, %v1152
  %1202 = vst.msk [vmem:[#allocation3 + $0x20] sm:$0xff] %vm224, %v1154
  %1203 = vst.msk [vmem:[#allocation3 + $0x30] sm:$0xff] %vm224, %v1156
  %1204 = vst.msk [vmem:[#allocation3 + $0x40] sm:$0xff] %vm224, %v1158
  %1205 = vst.msk [vmem:[#allocation3 + $0x50] sm:$0xff] %vm224, %v1160
  %1206 = vst.msk [vmem:[#allocation3 + $0x60] sm:$0xff] %vm224, %v1162
  %1207 = vst.msk [vmem:[#allocation3 + $0x70] sm:$0xff] %vm224, %v1164
  %1208 = vst.msk [vmem:[#allocation3 + $0x80] sm:$0xff] %vm224, %v1166
  %1209 = vst.msk [vmem:[#allocation3 + $0x90] sm:$0xff] %vm224, %v1168
  %1210 = vst.msk [vmem:[#allocation3 + $0xa0] sm:$0xff] %vm224, %v1170
  %1211 = vst.msk [vmem:[#allocation3 + $0xb0] sm:$0xff] %vm224, %v1172
  %1212 = vst.msk [vmem:[#allocation3 + $0xc0] sm:$0xff] %vm224, %v1174
  %1213 = vst.msk [vmem:[#allocation3 + $0xd0] sm:$0xff] %vm224, %v1176
  %1214 = vst.msk [vmem:[#allocation3 + $0xe0] sm:$0xff] %vm224, %v1178
  %1215 = vst.msk [vmem:[#allocation3 + $0xf0] sm:$0xff] %vm224, %v1180
  %1216 = vst.msk [vmem:[#allocation3 + $0x100] sm:$0x3f] %vm241, %v1182
  %v1217 = vld [vmem:[#allocation2 + $0x2] sm:$0xff]
  %v1218 = vld [vmem:[#allocation2 + $0xa] sm:$0xff]
  %v1219 = vld [vmem:[#allocation2 + $0x12] sm:$0xff]
  %v1220 = vld [vmem:[#allocation2 + $0x1a] sm:$0xff]
  %v1221 = vld [vmem:[#allocation2 + $0x22] sm:$0xff]
  %v1222 = vld [vmem:[#allocation2 + $0x2a] sm:$0xff]
  %v1223 = vld [vmem:[#allocation2 + $0x32] sm:$0xff]
  %v1224 = vld [vmem:[#allocation2 + $0x3a] sm:$0xff]
  %v1225 = vld [vmem:[#allocation2 + $0x42] sm:$0xff]
  %v1226 = vld [vmem:[#allocation2 + $0x4a] sm:$0xff]
  %v1227 = vld [vmem:[#allocation2 + $0x52] sm:$0xff]
  %v1228 = vld [vmem:[#allocation2 + $0x5a] sm:$0xff]
  %v1229 = vld [vmem:[#allocation2 + $0x62] sm:$0xff]
  %v1230 = vld [vmem:[#allocation2 + $0x6a] sm:$0xff]
  %v1231 = vld [vmem:[#allocation2 + $0x72] sm:$0xff]
  %v1232 = vld [vmem:[#allocation2 + $0x7a] sm:$0xff]
  %v1233 = vld [vmem:[#allocation2 + $0x82] sm:$0x3f]
  %1251 = vrot.lane.b32.xlu0 %v1217, 64
  %v1252 = vpop.permute.xlu0 %1251
  %1253 = vrot.lane.b32.xlu0 %v1218, 64
  %v1254 = vpop.permute.xlu0 %1253
  %1255 = vrot.lane.b32.xlu0 %v1219, 64
  %v1256 = vpop.permute.xlu0 %1255
  %1257 = vrot.lane.b32.xlu0 %v1220, 64
  %v1258 = vpop.permute.xlu0 %1257
  %1259 = vrot.lane.b32.xlu0 %v1221, 64
  %v1260 = vpop.permute.xlu0 %1259
  %1261 = vrot.lane.b32.xlu0 %v1222, 64
  %v1262 = vpop.permute.xlu0 %1261
  %1263 = vrot.lane.b32.xlu0 %v1223, 64
  %v1264 = vpop.permute.xlu0 %1263
  %1265 = vrot.lane.b32.xlu0 %v1224, 64
  %v1266 = vpop.permute.xlu0 %1265
  %1267 = vrot.lane.b32.xlu0 %v1225, 64
  %v1268 = vpop.permute.xlu0 %1267
  %1269 = vrot.lane.b32.xlu0 %v1226, 64
  %v1270 = vpop.permute.xlu0 %1269
  %1271 = vrot.lane.b32.xlu0 %v1227, 64
  %v1272 = vpop.permute.xlu0 %1271
  %1273 = vrot.lane.b32.xlu0 %v1228, 64
  %v1274 = vpop.permute.xlu0 %1273
  %1275 = vrot.lane.b32.xlu0 %v1229, 64
  %v1276 = vpop.permute.xlu0 %1275
  %1277 = vrot.lane.b32.xlu0 %v1230, 64
  %v1278 = vpop.permute.xlu0 %1277
  %1279 = vrot.lane.b32.xlu0 %v1231, 64
  %v1280 = vpop.permute.xlu0 %1279
  %1281 = vrot.lane.b32.xlu0 %v1232, 64
  %v1282 = vpop.permute.xlu0 %1281
  %1283 = vrot.lane.b32.xlu0 %v1233, 64
  %v1284 = vpop.permute.xlu0 %1283
  %1302 = vst.msk [vmem:[#allocation3] sm:$0xff] %vm328, %v1252
  %1303 = vst.msk [vmem:[#allocation3 + $0x10] sm:$0xff] %vm328, %v1254
  %1304 = vst.msk [vmem:[#allocation3 + $0x20] sm:$0xff] %vm328, %v1256
  %1305 = vst.msk [vmem:[#allocation3 + $0x30] sm:$0xff] %vm328, %v1258
  %1306 = vst.msk [vmem:[#allocation3 + $0x40] sm:$0xff] %vm328, %v1260
  %1307 = vst.msk [vmem:[#allocation3 + $0x50] sm:$0xff] %vm328, %v1262
  %1308 = vst.msk [vmem:[#allocation3 + $0x60] sm:$0xff] %vm328, %v1264
  %1309 = vst.msk [vmem:[#allocation3 + $0x70] sm:$0xff] %vm328, %v1266
  %1310 = vst.msk [vmem:[#allocation3 + $0x80] sm:$0xff] %vm328, %v1268
  %1311 = vst.msk [vmem:[#allocation3 + $0x90] sm:$0xff] %vm328, %v1270
  %1312 = vst.msk [vmem:[#allocation3 + $0xa0] sm:$0xff] %vm328, %v1272
  %1313 = vst.msk [vmem:[#allocation3 + $0xb0] sm:$0xff] %vm328, %v1274
  %1314 = vst.msk [vmem:[#allocation3 + $0xc0] sm:$0xff] %vm328, %v1276
  %1315 = vst.msk [vmem:[#allocation3 + $0xd0] sm:$0xff] %vm328, %v1278
  %1316 = vst.msk [vmem:[#allocation3 + $0xe0] sm:$0xff] %vm328, %v1280
  %1317 = vst.msk [vmem:[#allocation3 + $0xf0] sm:$0xff] %vm328, %v1282
  %1318 = vst.msk [vmem:[#allocation3 + $0x100] sm:$0x3f] %vm345, %v1284
  %v1319 = vld [vmem:[#allocation2 + $0x3] sm:$0xff]
  %v1320 = vld [vmem:[#allocation2 + $0xb] sm:$0xff]
  %v1321 = vld [vmem:[#allocation2 + $0x13] sm:$0xff]
  %v1322 = vld [vmem:[#allocation2 + $0x1b] sm:$0xff]
  %v1323 = vld [vmem:[#allocation2 + $0x23] sm:$0xff]
  %v1324 = vld [vmem:[#allocation2 + $0x2b] sm:$0xff]
  %v1325 = vld [vmem:[#allocation2 + $0x33] sm:$0xff]
  %v1326 = vld [vmem:[#allocation2 + $0x3b] sm:$0xff]
  %v1327 = vld [vmem:[#allocation2 + $0x43] sm:$0xff]
  %v1328 = vld [vmem:[#allocation2 + $0x4b] sm:$0xff]
  %v1329 = vld [vmem:[#allocation2 + $0x53] sm:$0xff]
  %v1330 = vld [vmem:[#allocation2 + $0x5b] sm:$0xff]
  %v1331 = vld [vmem:[#allocation2 + $0x63] sm:$0xff]
  %v1332 = vld [vmem:[#allocation2 + $0x6b] sm:$0xff]
  %v1333 = vld [vmem:[#allocation2 + $0x73] sm:$0xff]
  %v1334 = vld [vmem:[#allocation2 + $0x7b] sm:$0xff]
  %v1335 = vld [vmem:[#allocation2 + $0x83] sm:$0x3f]
  %1353 = vrot.lane.b32.xlu0 %v1319, 96
  %v1354 = vpop.permute.xlu0 %1353
  %1355 = vrot.lane.b32.xlu0 %v1320, 96
  %v1356 = vpop.permute.xlu0 %1355
  %1357 = vrot.lane.b32.xlu0 %v1321, 96
  %v1358 = vpop.permute.xlu0 %1357
  %1359 = vrot.lane.b32.xlu0 %v1322, 96
  %v1360 = vpop.permute.xlu0 %1359
  %1361 = vrot.lane.b32.xlu0 %v1323, 96
  %v1362 = vpop.permute.xlu0 %1361
  %1363 = vrot.lane.b32.xlu0 %v1324, 96
  %v1364 = vpop.permute.xlu0 %1363
  %1365 = vrot.lane.b32.xlu0 %v1325, 96
  %v1366 = vpop.permute.xlu0 %1365
  %1367 = vrot.lane.b32.xlu0 %v1326, 96
  %v1368 = vpop.permute.xlu0 %1367
  %1369 = vrot.lane.b32.xlu0 %v1327, 96
  %v1370 = vpop.permute.xlu0 %1369
  %1371 = vrot.lane.b32.xlu0 %v1328, 96
  %v1372 = vpop.permute.xlu0 %1371
  %1373 = vrot.lane.b32.xlu0 %v1329, 96
  %v1374 = vpop.permute.xlu0 %1373
  %1375 = vrot.lane.b32.xlu0 %v1330, 96
  %v1376 = vpop.permute.xlu0 %1375
  %1377 = vrot.lane.b32.xlu0 %v1331, 96
  %v1378 = vpop.permute.xlu0 %1377
  %1379 = vrot.lane.b32.xlu0 %v1332, 96
  %v1380 = vpop.permute.xlu0 %1379
  %1381 = vrot.lane.b32.xlu0 %v1333, 96
  %v1382 = vpop.permute.xlu0 %1381
  %1383 = vrot.lane.b32.xlu0 %v1334, 96
  %v1384 = vpop.permute.xlu0 %1383
  %1385 = vrot.lane.b32.xlu0 %v1335, 96
  %v1386 = vpop.permute.xlu0 %1385
  %1404 = vst.msk [vmem:[#allocation3] sm:$0xff] %vm52, %v1354
  %1405 = vst.msk [vmem:[#allocation3 + $0x10] sm:$0xff] %vm52, %v1356
  %1406 = vst.msk [vmem:[#allocation3 + $0x20] sm:$0xff] %vm52, %v1358
  %1407 = vst.msk [vmem:[#allocation3 + $0x30] sm:$0xff] %vm52, %v1360
  %1408 = vst.msk [vmem:[#allocation3 + $0x40] sm:$0xff] %vm52, %v1362
  %1409 = vst.msk [vmem:[#allocation3 + $0x50] sm:$0xff] %vm52, %v1364
  %1410 = vst.msk [vmem:[#allocation3 + $0x60] sm:$0xff] %vm52, %v1366
  %1411 = vst.msk [vmem:[#allocation3 + $0x70] sm:$0xff] %vm52, %v1368
  %1412 = vst.msk [vmem:[#allocation3 + $0x80] sm:$0xff] %vm52, %v1370
  %1413 = vst.msk [vmem:[#allocation3 + $0x90] sm:$0xff] %vm52, %v1372
  %1414 = vst.msk [vmem:[#allocation3 + $0xa0] sm:$0xff] %vm52, %v1374
  %1415 = vst.msk [vmem:[#allocation3 + $0xb0] sm:$0xff] %vm52, %v1376
  %1416 = vst.msk [vmem:[#allocation3 + $0xc0] sm:$0xff] %vm52, %v1378
  %1417 = vst.msk [vmem:[#allocation3 + $0xd0] sm:$0xff] %vm52, %v1380
  %1418 = vst.msk [vmem:[#allocation3 + $0xe0] sm:$0xff] %vm52, %v1382
  %1419 = vst.msk [vmem:[#allocation3 + $0xf0] sm:$0xff] %vm52, %v1384
  %1420 = vst.msk [vmem:[#allocation3 + $0x100] sm:$0x3f] %vm69, %v1386
  %v1421 = vld [vmem:[#allocation2 + $0x4] sm:$0xff]
  %v1422 = vld [vmem:[#allocation2 + $0xc] sm:$0xff]
  %v1423 = vld [vmem:[#allocation2 + $0x14] sm:$0xff]
  %v1424 = vld [vmem:[#allocation2 + $0x1c] sm:$0xff]
  %v1425 = vld [vmem:[#allocation2 + $0x24] sm:$0xff]
  %v1426 = vld [vmem:[#allocation2 + $0x2c] sm:$0xff]
  %v1427 = vld [vmem:[#allocation2 + $0x34] sm:$0xff]
  %v1428 = vld [vmem:[#allocation2 + $0x3c] sm:$0xff]
  %v1429 = vld [vmem:[#allocation2 + $0x44] sm:$0xff]
  %v1430 = vld [vmem:[#allocation2 + $0x4c] sm:$0xff]
  %v1431 = vld [vmem:[#allocation2 + $0x54] sm:$0xff]
  %v1432 = vld [vmem:[#allocation2 + $0x5c] sm:$0xff]
  %v1433 = vld [vmem:[#allocation2 + $0x64] sm:$0xff]
  %v1434 = vld [vmem:[#allocation2 + $0x6c] sm:$0xff]
  %v1435 = vld [vmem:[#allocation2 + $0x74] sm:$0xff]
  %v1436 = vld [vmem:[#allocation2 + $0x7c] sm:$0xff]
  %v1437 = vld [vmem:[#allocation2 + $0x84] sm:$0x3f]
  %1438 = vst.msk [vmem:[#allocation3 + $0x8] sm:$0xff] %vm32, %v1421
  %1439 = vst.msk [vmem:[#allocation3 + $0x18] sm:$0xff] %vm32, %v1422
  %1440 = vst.msk [vmem:[#allocation3 + $0x28] sm:$0xff] %vm32, %v1423
  %1441 = vst.msk [vmem:[#allocation3 + $0x38] sm:$0xff] %vm32, %v1424
  %1442 = vst.msk [vmem:[#allocation3 + $0x48] sm:$0xff] %vm32, %v1425
  %1443 = vst.msk [vmem:[#allocation3 + $0x58] sm:$0xff] %vm32, %v1426
  %1444 = vst.msk [vmem:[#allocation3 + $0x68] sm:$0xff] %vm32, %v1427
  %1445 = vst.msk [vmem:[#allocation3 + $0x78] sm:$0xff] %vm32, %v1428
  %1446 = vst.msk [vmem:[#allocation3 + $0x88] sm:$0xff] %vm32, %v1429
  %1447 = vst.msk [vmem:[#allocation3 + $0x98] sm:$0xff] %vm32, %v1430
  %1448 = vst.msk [vmem:[#allocation3 + $0xa8] sm:$0xff] %vm32, %v1431
  %1449 = vst.msk [vmem:[#allocation3 + $0xb8] sm:$0xff] %vm32, %v1432
  %1450 = vst.msk [vmem:[#allocation3 + $0xc8] sm:$0xff] %vm32, %v1433
  %1451 = vst.msk [vmem:[#allocation3 + $0xd8] sm:$0xff] %vm32, %v1434
  %1452 = vst.msk [vmem:[#allocation3 + $0xe8] sm:$0xff] %vm32, %v1435
  %1453 = vst.msk [vmem:[#allocation3 + $0xf8] sm:$0xff] %vm32, %v1436
  %1454 = vst.msk [vmem:[#allocation3 + $0x108] sm:$0x3f] %vm137, %v1437
  %v1455 = vld [vmem:[#allocation2 + $0x5] sm:$0xff]
  %v1456 = vld [vmem:[#allocation2 + $0xd] sm:$0xff]
  %v1457 = vld [vmem:[#allocation2 + $0x15] sm:$0xff]
  %v1458 = vld [vmem:[#allocation2 + $0x1d] sm:$0xff]
  %v1459 = vld [vmem:[#allocation2 + $0x25] sm:$0xff]
  %v1460 = vld [vmem:[#allocation2 + $0x2d] sm:$0xff]
  %v1461 = vld [vmem:[#allocation2 + $0x35] sm:$0xff]
  %v1462 = vld [vmem:[#allocation2 + $0x3d] sm:$0xff]
  %v1463 = vld [vmem:[#allocation2 + $0x45] sm:$0xff]
  %v1464 = vld [vmem:[#allocation2 + $0x4d] sm:$0xff]
  %v1465 = vld [vmem:[#allocation2 + $0x55] sm:$0xff]
  %v1466 = vld [vmem:[#allocation2 + $0x5d] sm:$0xff]
  %v1467 = vld [vmem:[#allocation2 + $0x65] sm:$0xff]
  %v1468 = vld [vmem:[#allocation2 + $0x6d] sm:$0xff]
  %v1469 = vld [vmem:[#allocation2 + $0x75] sm:$0xff]
  %v1470 = vld [vmem:[#allocation2 + $0x7d] sm:$0xff]
  %v1471 = vld [vmem:[#allocation2 + $0x85] sm:$0x3f]
  %1489 = vrot.lane.b32.xlu0 %v1455, 32
  %v1490 = vpop.permute.xlu0 %1489
  %1491 = vrot.lane.b32.xlu0 %v1456, 32
  %v1492 = vpop.permute.xlu0 %1491
  %1493 = vrot.lane.b32.xlu0 %v1457, 32
  %v1494 = vpop.permute.xlu0 %1493
  %1495 = vrot.lane.b32.xlu0 %v1458, 32
  %v1496 = vpop.permute.xlu0 %1495
  %1497 = vrot.lane.b32.xlu0 %v1459, 32
  %v1498 = vpop.permute.xlu0 %1497
  %1499 = vrot.lane.b32.xlu0 %v1460, 32
  %v1500 = vpop.permute.xlu0 %1499
  %1501 = vrot.lane.b32.xlu0 %v1461, 32
  %v1502 = vpop.permute.xlu0 %1501
  %1503 = vrot.lane.b32.xlu0 %v1462, 32
  %v1504 = vpop.permute.xlu0 %1503
  %1505 = vrot.lane.b32.xlu0 %v1463, 32
  %v1506 = vpop.permute.xlu0 %1505
  %1507 = vrot.lane.b32.xlu0 %v1464, 32
  %v1508 = vpop.permute.xlu0 %1507
  %1509 = vrot.lane.b32.xlu0 %v1465, 32
  %v1510 = vpop.permute.xlu0 %1509
  %1511 = vrot.lane.b32.xlu0 %v1466, 32
  %v1512 = vpop.permute.xlu0 %1511
  %1513 = vrot.lane.b32.xlu0 %v1467, 32
  %v1514 = vpop.permute.xlu0 %1513
  %1515 = vrot.lane.b32.xlu0 %v1468, 32
  %v1516 = vpop.permute.xlu0 %1515
  %1517 = vrot.lane.b32.xlu0 %v1469, 32
  %v1518 = vpop.permute.xlu0 %1517
  %1519 = vrot.lane.b32.xlu0 %v1470, 32
  %v1520 = vpop.permute.xlu0 %1519
  %1521 = vrot.lane.b32.xlu0 %v1471, 32
  %v1522 = vpop.permute.xlu0 %1521
  %1540 = vst.msk [vmem:[#allocation3 + $0x8] sm:$0xff] %vm224, %v1490
  %1541 = vst.msk [vmem:[#allocation3 + $0x18] sm:$0xff] %vm224, %v1492
  %1542 = vst.msk [vmem:[#allocation3 + $0x28] sm:$0xff] %vm224, %v1494
  %1543 = vst.msk [vmem:[#allocation3 + $0x38] sm:$0xff] %vm224, %v1496
  %1544 = vst.msk [vmem:[#allocation3 + $0x48] sm:$0xff] %vm224, %v1498
  %1545 = vst.msk [vmem:[#allocation3 + $0x58] sm:$0xff] %vm224, %v1500
  %1546 = vst.msk [vmem:[#allocation3 + $0x68] sm:$0xff] %vm224, %v1502
  %1547 = vst.msk [vmem:[#allocation3 + $0x78] sm:$0xff] %vm224, %v1504
  %1548 = vst.msk [vmem:[#allocation3 + $0x88] sm:$0xff] %vm224, %v1506
  %1549 = vst.msk [vmem:[#allocation3 + $0x98] sm:$0xff] %vm224, %v1508
  %1550 = vst.msk [vmem:[#allocation3 + $0xa8] sm:$0xff] %vm224, %v1510
  %1551 = vst.msk [vmem:[#allocation3 + $0xb8] sm:$0xff] %vm224, %v1512
  %1552 = vst.msk [vmem:[#allocation3 + $0xc8] sm:$0xff] %vm224, %v1514
  %1553 = vst.msk [vmem:[#allocation3 + $0xd8] sm:$0xff] %vm224, %v1516
  %1554 = vst.msk [vmem:[#allocation3 + $0xe8] sm:$0xff] %vm224, %v1518
  %1555 = vst.msk [vmem:[#allocation3 + $0xf8] sm:$0xff] %vm224, %v1520
  %1556 = vst.msk [vmem:[#allocation3 + $0x108] sm:$0x3f] %vm241, %v1522
  %v1557 = vld [vmem:[#allocation2 + $0x6] sm:$0xff]
  %v1558 = vld [vmem:[#allocation2 + $0xe] sm:$0xff]
  %v1559 = vld [vmem:[#allocation2 + $0x16] sm:$0xff]
  %v1560 = vld [vmem:[#allocation2 + $0x1e] sm:$0xff]
  %v1561 = vld [vmem:[#allocation2 + $0x26] sm:$0xff]
  %v1562 = vld [vmem:[#allocation2 + $0x2e] sm:$0xff]
  %v1563 = vld [vmem:[#allocation2 + $0x36] sm:$0xff]
  %v1564 = vld [vmem:[#allocation2 + $0x3e] sm:$0xff]
  %v1565 = vld [vmem:[#allocation2 + $0x46] sm:$0xff]
  %v1566 = vld [vmem:[#allocation2 + $0x4e] sm:$0xff]
  %v1567 = vld [vmem:[#allocation2 + $0x56] sm:$0xff]
  %v1568 = vld [vmem:[#allocation2 + $0x5e] sm:$0xff]
  %v1569 = vld [vmem:[#allocation2 + $0x66] sm:$0xff]
  %v1570 = vld [vmem:[#allocation2 + $0x6e] sm:$0xff]
  %v1571 = vld [vmem:[#allocation2 + $0x76] sm:$0xff]
  %v1572 = vld [vmem:[#allocation2 + $0x7e] sm:$0xff]
  %v1573 = vld [vmem:[#allocation2 + $0x86] sm:$0x3f]
  %1591 = vrot.lane.b32.xlu0 %v1557, 64
  %v1592 = vpop.permute.xlu0 %1591
  %1593 = vrot.lane.b32.xlu0 %v1558, 64
  %v1594 = vpop.permute.xlu0 %1593
  %1595 = vrot.lane.b32.xlu0 %v1559, 64
  %v1596 = vpop.permute.xlu0 %1595
  %1597 = vrot.lane.b32.xlu0 %v1560, 64
  %v1598 = vpop.permute.xlu0 %1597
  %1599 = vrot.lane.b32.xlu0 %v1561, 64
  %v1600 = vpop.permute.xlu0 %1599
  %1601 = vrot.lane.b32.xlu0 %v1562, 64
  %v1602 = vpop.permute.xlu0 %1601
  %1603 = vrot.lane.b32.xlu0 %v1563, 64
  %v1604 = vpop.permute.xlu0 %1603
  %1605 = vrot.lane.b32.xlu0 %v1564, 64
  %v1606 = vpop.permute.xlu0 %1605
  %1607 = vrot.lane.b32.xlu0 %v1565, 64
  %v1608 = vpop.permute.xlu0 %1607
  %1609 = vrot.lane.b32.xlu0 %v1566, 64
  %v1610 = vpop.permute.xlu0 %1609
  %1611 = vrot.lane.b32.xlu0 %v1567, 64
  %v1612 = vpop.permute.xlu0 %1611
  %1613 = vrot.lane.b32.xlu0 %v1568, 64
  %v1614 = vpop.permute.xlu0 %1613
  %1615 = vrot.lane.b32.xlu0 %v1569, 64
  %v1616 = vpop.permute.xlu0 %1615
  %1617 = vrot.lane.b32.xlu0 %v1570, 64
  %v1618 = vpop.permute.xlu0 %1617
  %1619 = vrot.lane.b32.xlu0 %v1571, 64
  %v1620 = vpop.permute.xlu0 %1619
  %1621 = vrot.lane.b32.xlu0 %v1572, 64
  %v1622 = vpop.permute.xlu0 %1621
  %1623 = vrot.lane.b32.xlu0 %v1573, 64
  %v1624 = vpop.permute.xlu0 %1623
  %1642 = vst.msk [vmem:[#allocation3 + $0x8] sm:$0xff] %vm328, %v1592
  %1643 = vst.msk [vmem:[#allocation3 + $0x18] sm:$0xff] %vm328, %v1594
  %1644 = vst.msk [vmem:[#allocation3 + $0x28] sm:$0xff] %vm328, %v1596
  %1645 = vst.msk [vmem:[#allocation3 + $0x38] sm:$0xff] %vm328, %v1598
  %1646 = vst.msk [vmem:[#allocation3 + $0x48] sm:$0xff] %vm328, %v1600
  %1647 = vst.msk [vmem:[#allocation3 + $0x58] sm:$0xff] %vm328, %v1602
  %1648 = vst.msk [vmem:[#allocation3 + $0x68] sm:$0xff] %vm328, %v1604
  %1649 = vst.msk [vmem:[#allocation3 + $0x78] sm:$0xff] %vm328, %v1606
  %1650 = vst.msk [vmem:[#allocation3 + $0x88] sm:$0xff] %vm328, %v1608
  %1651 = vst.msk [vmem:[#allocation3 + $0x98] sm:$0xff] %vm328, %v1610
  %1652 = vst.msk [vmem:[#allocation3 + $0xa8] sm:$0xff] %vm328, %v1612
  %1653 = vst.msk [vmem:[#allocation3 + $0xb8] sm:$0xff] %vm328, %v1614
  %1654 = vst.msk [vmem:[#allocation3 + $0xc8] sm:$0xff] %vm328, %v1616
  %1655 = vst.msk [vmem:[#allocation3 + $0xd8] sm:$0xff] %vm328, %v1618
  %1656 = vst.msk [vmem:[#allocation3 + $0xe8] sm:$0xff] %vm328, %v1620
  %1657 = vst.msk [vmem:[#allocation3 + $0xf8] sm:$0xff] %vm328, %v1622
  %1658 = vst.msk [vmem:[#allocation3 + $0x108] sm:$0x3f] %vm345, %v1624
  %v1659 = vld [vmem:[#allocation3] sm:$0xff]
  %v1660 = vld [vmem:[#allocation3 + $0x8] sm:$0xff]
  %v1661 = vld [vmem:[#allocation3 + $0x10] sm:$0xff]
  %v1662 = vld [vmem:[#allocation3 + $0x18] sm:$0xff]
  %v1663 = vld [vmem:[#allocation3 + $0x20] sm:$0xff]
  %v1664 = vld [vmem:[#allocation3 + $0x28] sm:$0xff]
  %v1665 = vld [vmem:[#allocation3 + $0x30] sm:$0xff]
  %v1666 = vld [vmem:[#allocation3 + $0x38] sm:$0xff]
  %v1667 = vld [vmem:[#allocation3 + $0x40] sm:$0xff]
  %v1668 = vld [vmem:[#allocation3 + $0x48] sm:$0xff]
  %v1669 = vld [vmem:[#allocation3 + $0x50] sm:$0xff]
  %v1670 = vld [vmem:[#allocation3 + $0x58] sm:$0xff]
  %v1671 = vld [vmem:[#allocation3 + $0x60] sm:$0xff]
  %v1672 = vld [vmem:[#allocation3 + $0x68] sm:$0xff]
  %v1673 = vld [vmem:[#allocation3 + $0x70] sm:$0xff]
  %v1674 = vld [vmem:[#allocation3 + $0x78] sm:$0xff]
  %v1675 = vld [vmem:[#allocation3 + $0x80] sm:$0xff]
  %v1676 = vld [vmem:[#allocation3 + $0x88] sm:$0xff]
  %v1677 = vld [vmem:[#allocation3 + $0x90] sm:$0xff]
  %v1678 = vld [vmem:[#allocation3 + $0x98] sm:$0xff]
  %v1679 = vld [vmem:[#allocation3 + $0xa0] sm:$0xff]
  %v1680 = vld [vmem:[#allocation3 + $0xa8] sm:$0xff]
  %v1681 = vld [vmem:[#allocation3 + $0xb0] sm:$0xff]
  %v1682 = vld [vmem:[#allocation3 + $0xb8] sm:$0xff]
  %v1683 = vld [vmem:[#allocation3 + $0xc0] sm:$0xff]
  %v1684 = vld [vmem:[#allocation3 + $0xc8] sm:$0xff]
  %v1685 = vld [vmem:[#allocation3 + $0xd0] sm:$0xff]
  %v1686 = vld [vmem:[#allocation3 + $0xd8] sm:$0xff]
  %v1687 = vld [vmem:[#allocation3 + $0xe0] sm:$0xff]
  %v1688 = vld [vmem:[#allocation3 + $0xe8] sm:$0xff]
  %v1689 = vld [vmem:[#allocation3 + $0xf0] sm:$0xff]
  %v1690 = vld [vmem:[#allocation3 + $0xf8] sm:$0xff]
  %v1691 = vld [vmem:[#allocation3 + $0x100] sm:$0x3f]
  %v1692 = vld [vmem:[#allocation3 + $0x108] sm:$0x3f]
  %v1693 = vpack.c.bf16 %v1661, %v1659
  %v1694 = vpack.c.bf16 %v1662, %v1660
  %v1695 = vpack.c.bf16 %v1665, %v1663
  %v1696 = vpack.c.bf16 %v1666, %v1664
  %v1697 = vpack.c.bf16 %v1669, %v1667
  %v1698 = vpack.c.bf16 %v1670, %v1668
  %v1699 = vpack.c.bf16 %v1673, %v1671
  %v1700 = vpack.c.bf16 %v1674, %v1672
  %v1701 = vpack.c.bf16 %v1677, %v1675
  %v1702 = vpack.c.bf16 %v1678, %v1676
  %v1703 = vpack.c.bf16 %v1681, %v1679
  %v1704 = vpack.c.bf16 %v1682, %v1680
  %v1705 = vpack.c.bf16 %v1685, %v1683
  %v1706 = vpack.c.bf16 %v1686, %v1684
  %v1707 = vpack.c.bf16 %v1689, %v1687
  %v1708 = vpack.c.bf16 %v1690, %v1688
  %v1709 = vpack.c.bf16 %v1691, %v1691
  %v1710 = vpack.c.bf16 %v1692, %v1692
  %v1711 = vld [vmem:[%s4] sm:$0xf]
  %v1712 = vld [vmem:[%s4 + $0x4] sm:$0xf]
  %v1713 = vld [vmem:[%s4 + $0x8] sm:$0xf]
  %v1714 = vld [vmem:[%s4 + $0xc] sm:$0xf]
  %v1715 = vld [vmem:[%s4 + $0x10] sm:$0xf]
  %v1716 = vld [vmem:[%s4 + $0x14] sm:$0xf]
  %v1717 = vld [vmem:[%s4 + $0x18] sm:$0xf]
  %v1718 = vld [vmem:[%s4 + $0x1c] sm:$0xf]
  %v1719 = vld [vmem:[%s4 + $0x20] sm:$0xf]
  %v1720 = vld [vmem:[%s4 + $0x24] sm:$0xf]
  %v1721 = vld [vmem:[%s4 + $0x28] sm:$0xf]
  %v1722 = vld [vmem:[%s4 + $0x2c] sm:$0xf]
  %v1723 = vld [vmem:[%s4 + $0x30] sm:$0xf]
  %v1724 = vld [vmem:[%s4 + $0x34] sm:$0xf]
  %v1725 = vld [vmem:[%s4 + $0x38] sm:$0xf]
  %v1726 = vld [vmem:[%s4 + $0x3c] sm:$0xf]
  %v1727 = vld [vmem:[%s4 + $0x40] sm:$0xf]
  %v1728 = vld [vmem:[%s4 + $0x44] sm:$0xf]
  %v1729 = vld [vmem:[%s4 + $0x48] sm:$0xf]
  %v1730 = vld [vmem:[%s4 + $0x4c] sm:$0xf]
  %v1731 = vld [vmem:[%s4 + $0x50] sm:$0xf]
  %v1732 = vld [vmem:[%s4 + $0x54] sm:$0xf]
  %v1733 = vld [vmem:[%s4 + $0x58] sm:$0xf]
  %v1734 = vld [vmem:[%s4 + $0x5c] sm:$0xf]
  %v1735 = vld [vmem:[%s4 + $0x60] sm:$0xf]
  %v1736 = vld [vmem:[%s4 + $0x64] sm:$0xf]
  %v1737 = vld [vmem:[%s4 + $0x68] sm:$0xf]
  %v1738 = vld [vmem:[%s4 + $0x6c] sm:$0xf]
  %v1739 = vld [vmem:[%s4 + $0x70] sm:$0xf]
  %v1740 = vld [vmem:[%s4 + $0x74] sm:$0xf]
  %v1741 = vld [vmem:[%s4 + $0x78] sm:$0xf]
  %v1742 = vld [vmem:[%s4 + $0x7c] sm:$0xf]
  %v1775 = vunpack.c.l.b16 %v1711
  %v1776 = vunpack.c.l.b16 %v1712
  %v1777 = vunpack.c.l.b16 %v1713
  %v1778 = vunpack.c.l.b16 %v1714
  %v1779 = vunpack.c.l.b16 %v1715
  %v1780 = vunpack.c.l.b16 %v1716
  %v1781 = vunpack.c.l.b16 %v1717
  %v1782 = vunpack.c.l.b16 %v1718
  %v1783 = vunpack.c.l.b16 %v1719
  %v1784 = vunpack.c.l.b16 %v1720
  %v1785 = vunpack.c.l.b16 %v1721
  %v1786 = vunpack.c.l.b16 %v1722
  %v1787 = vunpack.c.l.b16 %v1723
  %v1788 = vunpack.c.l.b16 %v1724
  %v1789 = vunpack.c.l.b16 %v1725
  %v1790 = vunpack.c.l.b16 %v1726
  %v1791 = vunpack.c.l.b16 %v1727
  %v1792 = vunpack.c.l.b16 %v1728
  %v1793 = vunpack.c.l.b16 %v1729
  %v1794 = vunpack.c.l.b16 %v1730
  %v1795 = vunpack.c.l.b16 %v1731
  %v1796 = vunpack.c.l.b16 %v1732
  %v1797 = vunpack.c.l.b16 %v1733
  %v1798 = vunpack.c.l.b16 %v1734
  %v1799 = vunpack.c.l.b16 %v1735
  %v1800 = vunpack.c.l.b16 %v1736
  %v1801 = vunpack.c.l.b16 %v1737
  %v1802 = vunpack.c.l.b16 %v1738
  %v1803 = vunpack.c.l.b16 %v1739
  %v1804 = vunpack.c.l.b16 %v1740
  %v1805 = vunpack.c.l.b16 %v1741
  %v1806 = vunpack.c.l.b16 %v1742
  %v1807 = vpack.c.b16 %v1776, %v1775
  %v1808 = vpack.c.b16 %v1778, %v1777
  %v1809 = vpack.c.b16 %v1780, %v1779
  %v1810 = vpack.c.b16 %v1782, %v1781
  %v1811 = vpack.c.b16 %v1784, %v1783
  %v1812 = vpack.c.b16 %v1786, %v1785
  %v1813 = vpack.c.b16 %v1788, %v1787
  %v1814 = vpack.c.b16 %v1790, %v1789
  %v1815 = vpack.c.b16 %v1792, %v1791
  %v1816 = vpack.c.b16 %v1794, %v1793
  %v1817 = vpack.c.b16 %v1796, %v1795
  %v1818 = vpack.c.b16 %v1798, %v1797
  %v1819 = vpack.c.b16 %v1800, %v1799
  %v1820 = vpack.c.b16 %v1802, %v1801
  %v1821 = vpack.c.b16 %v1804, %v1803
  %v1822 = vpack.c.b16 %v1806, %v1805
  %1839 = vmatpush.bf16.msra.mxu0 %v1814
  %1840 = vmatpush.bf16.msra.mxu0 %v1813
  %1841 = vmatpush.bf16.msra.mxu0 %v1812
  %1842 = vmatpush.bf16.msra.mxu0 %v1811
  %1843 = vmatpush.bf16.msra.mxu0 %v1810
  %1844 = vmatpush.bf16.msra.mxu0 %v1809
  %1845 = vmatpush.bf16.msra.mxu0 %v1808
  %1846 = vmatpush.bf16.msra.mxu0 %v1807
  %1847 = vmatmul.bf16.gmra.mxu0 %v1693
  %v1848 = vpop.f32.mrf.mxu0
  %v1849 = vadd.f32 0.0, %v1848
  %v1850 = vpop.f32.mrf.mxu0
  %v1851 = vadd.f32 0.0, %v1850
  %1852 = vmatmul.bf16.gmra.mxu0 %v1695
  %v1853 = vpop.f32.mrf.mxu0
  %v1854 = vadd.f32 0.0, %v1853
  %v1855 = vpop.f32.mrf.mxu0
  %v1856 = vadd.f32 0.0, %v1855
  %1857 = vmatmul.bf16.gmra.mxu0 %v1697
  %v1858 = vpop.f32.mrf.mxu0
  %v1859 = vadd.f32 0.0, %v1858
  %v1860 = vpop.f32.mrf.mxu0
  %v1861 = vadd.f32 0.0, %v1860
  %1862 = vmatmul.bf16.gmra.mxu0 %v1699
  %v1863 = vpop.f32.mrf.mxu0
  %v1864 = vadd.f32 0.0, %v1863
  %v1865 = vpop.f32.mrf.mxu0
  %v1866 = vadd.f32 0.0, %v1865
  %1867 = vmatmul.bf16.gmra.mxu0 %v1701
  %v1868 = vpop.f32.mrf.mxu0
  %v1869 = vadd.f32 0.0, %v1868
  %v1870 = vpop.f32.mrf.mxu0
  %v1871 = vadd.f32 0.0, %v1870
  %1872 = vmatmul.bf16.gmra.mxu0 %v1703
  %v1873 = vpop.f32.mrf.mxu0
  %v1874 = vadd.f32 0.0, %v1873
  %v1875 = vpop.f32.mrf.mxu0
  %v1876 = vadd.f32 0.0, %v1875
  %1877 = vmatmul.bf16.gmra.mxu0 %v1705
  %v1878 = vpop.f32.mrf.mxu0
  %v1879 = vadd.f32 0.0, %v1878
  %v1880 = vpop.f32.mrf.mxu0
  %v1881 = vadd.f32 0.0, %v1880
  %1882 = vmatmul.bf16.gmra.mxu0 %v1707
  %v1883 = vpop.f32.mrf.mxu0
  %v1884 = vadd.f32 0.0, %v1883
  %v1885 = vpop.f32.mrf.mxu0
  %v1886 = vadd.f32 0.0, %v1885
  %1887 = vmatmul.bf16.gmra.mxu0 %v1709
  %v1888 = vpop.f32.mrf.mxu0
  %v1889 = vadd.f32 0.0, %v1888
  %v1890 = vpop.f32.mrf.mxu0
  %1891 = vdwg.mxu0
  %1892 = vmatpush.bf16.msra.mxu0 %v1822
  %1893 = vmatpush.bf16.msra.mxu0 %v1821
  %1894 = vmatpush.bf16.msra.mxu0 %v1820
  %1895 = vmatpush.bf16.msra.mxu0 %v1819
  %1896 = vmatpush.bf16.msra.mxu0 %v1818
  %1897 = vmatpush.bf16.msra.mxu0 %v1817
  %1898 = vmatpush.bf16.msra.mxu0 %v1816
  %1899 = vmatpush.bf16.msra.mxu0 %v1815
  %1900 = vmatmul.bf16.gmra.mxu0 %v1694
  %v1901 = vpop.f32.mrf.mxu0
  %v1902 = vadd.f32 %v1849, %v1901
  %v1903 = vpop.f32.mrf.mxu0
  %v1904 = vadd.f32 %v1851, %v1903
  %1905 = vmatmul.bf16.gmra.mxu0 %v1696
  %v1906 = vpop.f32.mrf.mxu0
  %v1907 = vadd.f32 %v1854, %v1906
  %v1908 = vpop.f32.mrf.mxu0
  %v1909 = vadd.f32 %v1856, %v1908
  %1910 = vmatmul.bf16.gmra.mxu0 %v1698
  %v1911 = vpop.f32.mrf.mxu0
  %v1912 = vadd.f32 %v1859, %v1911
  %v1913 = vpop.f32.mrf.mxu0
  %v1914 = vadd.f32 %v1861, %v1913
  %1915 = vmatmul.bf16.gmra.mxu0 %v1700
  %v1916 = vpop.f32.mrf.mxu0
  %v1917 = vadd.f32 %v1864, %v1916
  %v1918 = vpop.f32.mrf.mxu0
  %v1919 = vadd.f32 %v1866, %v1918
  %1920 = vmatmul.bf16.gmra.mxu0 %v1702
  %v1921 = vpop.f32.mrf.mxu0
  %v1922 = vadd.f32 %v1869, %v1921
  %v1923 = vpop.f32.mrf.mxu0
  %v1924 = vadd.f32 %v1871, %v1923
  %1925 = vmatmul.bf16.gmra.mxu0 %v1704
  %v1926 = vpop.f32.mrf.mxu0
  %v1927 = vadd.f32 %v1874, %v1926
  %v1928 = vpop.f32.mrf.mxu0
  %v1929 = vadd.f32 %v1876, %v1928
  %1930 = vmatmul.bf16.gmra.mxu0 %v1706
  %v1931 = vpop.f32.mrf.mxu0
  %v1932 = vadd.f32 %v1879, %v1931
  %v1933 = vpop.f32.mrf.mxu0
  %v1934 = vadd.f32 %v1881, %v1933
  %1935 = vmatmul.bf16.gmra.mxu0 %v1708
  %v1936 = vpop.f32.mrf.mxu0
  %v1937 = vadd.f32 %v1884, %v1936
  %v1938 = vpop.f32.mrf.mxu0
  %v1939 = vadd.f32 %v1886, %v1938
  %1940 = vmatmul.bf16.gmra.mxu0 %v1710
  %v1941 = vpop.f32.mrf.mxu0
  %v1942 = vadd.f32 %v1889, %v1941
  %v1943 = vpop.f32.mrf.mxu0
  %1944 = vdwg.mxu0
  %v1945 = vld [vmem:[%s5] sm:$0x1]
  %v1947 = vperm.slane %v1945, 0
  %v1949 = vmul.f32 %v1902, %v1947
  %v1950 = vmul.f32 %v1904, %v1947
  %v1951 = vmul.f32 %v1907, %v1947
  %v1952 = vmul.f32 %v1909, %v1947
  %v1953 = vmul.f32 %v1912, %v1947
  %v1954 = vmul.f32 %v1914, %v1947
  %v1955 = vmul.f32 %v1917, %v1947
  %v1956 = vmul.f32 %v1919, %v1947
  %v1957 = vmul.f32 %v1922, %v1947
  %v1958 = vmul.f32 %v1924, %v1947
  %v1959 = vmul.f32 %v1927, %v1947
  %v1960 = vmul.f32 %v1929, %v1947
  %v1961 = vmul.f32 %v1932, %v1947
  %v1962 = vmul.f32 %v1934, %v1947
  %v1963 = vmul.f32 %v1937, %v1947
  %v1964 = vmul.f32 %v1939, %v1947
  %v1965 = vmul.f32 %v1942, %v1947
  %v1966 = vld [vmem:[%s6] sm:$0x1]
  %v1968 = vperm.slane %v1966, 0
  %v1970 = vadd.f32 %v1949, %v1968
  %v1971 = vadd.f32 %v1950, %v1968
  %v1972 = vadd.f32 %v1951, %v1968
  %v1973 = vadd.f32 %v1952, %v1968
  %v1974 = vadd.f32 %v1953, %v1968
  %v1975 = vadd.f32 %v1954, %v1968
  %v1976 = vadd.f32 %v1955, %v1968
  %v1977 = vadd.f32 %v1956, %v1968
  %v1978 = vadd.f32 %v1957, %v1968
  %v1979 = vadd.f32 %v1958, %v1968
  %v1980 = vadd.f32 %v1959, %v1968
  %v1981 = vadd.f32 %v1960, %v1968
  %v1982 = vadd.f32 %v1961, %v1968
  %v1983 = vadd.f32 %v1962, %v1968
  %v1984 = vadd.f32 %v1963, %v1968
  %v1985 = vadd.f32 %v1964, %v1968
  %v1986 = vadd.f32 %v1965, %v1968
  %1987 = vst.msk [vmem:[#allocation4] sm:$0xff] %vm32, %v1970
  %1988 = vst.msk [vmem:[#allocation4 + $0x8] sm:$0xff] %vm32, %v1971
  %1989 = vst.msk [vmem:[#allocation4 + $0x10] sm:$0xff] %vm32, %v1972
  %1990 = vst.msk [vmem:[#allocation4 + $0x18] sm:$0xff] %vm32, %v1973
  %1991 = vst.msk [vmem:[#allocation4 + $0x20] sm:$0xff] %vm32, %v1974
  %1992 = vst.msk [vmem:[#allocation4 + $0x28] sm:$0xff] %vm32, %v1975
  %1993 = vst.msk [vmem:[#allocation4 + $0x30] sm:$0xff] %vm32, %v1976
  %1994 = vst.msk [vmem:[#allocation4 + $0x38] sm:$0xff] %vm32, %v1977
  %1995 = vst.msk [vmem:[#allocation4 + $0x40] sm:$0xff] %vm32, %v1978
  %1996 = vst.msk [vmem:[#allocation4 + $0x48] sm:$0xff] %vm32, %v1979
  %1997 = vst.msk [vmem:[#allocation4 + $0x50] sm:$0xff] %vm32, %v1980
  %1998 = vst.msk [vmem:[#allocation4 + $0x58] sm:$0xff] %vm32, %v1981
  %1999 = vst.msk [vmem:[#allocation4 + $0x60] sm:$0xff] %vm32, %v1982
  %2000 = vst.msk [vmem:[#allocation4 + $0x68] sm:$0xff] %vm32, %v1983
  %2001 = vst.msk [vmem:[#allocation4 + $0x70] sm:$0xff] %vm32, %v1984
  %2002 = vst.msk [vmem:[#allocation4 + $0x78] sm:$0xff] %vm32, %v1985
  %2003 = vst.msk [vmem:[#allocation4 + $0x80] sm:$0x3f] %vm137, %v1986
  %v2004 = vld [vmem:[#allocation4] sm:$0xff]
  %v2005 = vld [vmem:[#allocation4 + $0x8] sm:$0xff]
  %v2006 = vld [vmem:[#allocation4 + $0x10] sm:$0xff]
  %v2007 = vld [vmem:[#allocation4 + $0x18] sm:$0xff]
  %v2008 = vld [vmem:[#allocation4 + $0x20] sm:$0xff]
  %v2009 = vld [vmem:[#allocation4 + $0x28] sm:$0xff]
  %v2010 = vld [vmem:[#allocation4 + $0x30] sm:$0xff]
  %v2011 = vld [vmem:[#allocation4 + $0x38] sm:$0xff]
  %v2012 = vsel %vm32, %v2004, 0.0
  %v2013 = vsel %vm32, %v2005, 0.0
  %v2014 = vadd.f32 %v2012, %v2013
  %v2015 = vsel %vm32, %v2006, 0.0
  %v2016 = vadd.f32 %v2014, %v2015
  %v2017 = vsel %vm32, %v2007, 0.0
  %v2018 = vadd.f32 %v2016, %v2017
  %v2019 = vsel %vm32, %v2008, 0.0
  %v2020 = vadd.f32 %v2018, %v2019
  %v2021 = vsel %vm32, %v2009, 0.0
  %v2022 = vadd.f32 %v2020, %v2021
  %v2023 = vsel %vm32, %v2010, 0.0
  %v2024 = vadd.f32 %v2022, %v2023
  %v2025 = vsel %vm32, %v2011, 0.0
  %v2026 = vadd.f32 %v2024, %v2025
  %v2027 = vrot.slane %v2026, 4
  %v2028 = vadd.f32 %v2026, %v2027
  %v2029 = vrot.slane %v2028, 2
  %v2030 = vadd.f32 %v2028, %v2029
  %v2031 = vrot.slane %v2030, 1
  %v2032 = vadd.f32 %v2030, %v2031
  %v2033 = vrcp.pop 64.0
  %v2034 = vmul.f32 64.0, %v2033
  %v2035 = vsub.f32 1.0, %v2034
  %v2036 = vmul.f32 %v2033, %v2035
  %v2037 = vadd.f32 %v2033, %v2036
  %vm2038 = vweird.f32 %v2033
  %v2039 = vsel %vm2038, %v2033, %v2037
  %v2040 = vmul.f32 %v2032, %v2039
  %vm2041 = vcmask 253952
  %2042 = vst.msk [vmem:[#allocation5] sm:$0x1] %vm2041, %v2040
  %v2043 = vld [vmem:[#allocation4 + $0x46] sm:$0xff]
  %v2044 = vld [vmem:[#allocation4 + $0x4e] sm:$0xff]
  %v2045 = vld [vmem:[#allocation4 + $0x56] sm:$0xff]
  %v2046 = vld [vmem:[#allocation4 + $0x5e] sm:$0xff]
  %v2047 = vld [vmem:[#allocation4 + $0x66] sm:$0xff]
  %v2048 = vld [vmem:[#allocation4 + $0x6e] sm:$0xff]
  %v2049 = vld [vmem:[#allocation4 + $0x76] sm:$0xff]
  %v2050 = vld [vmem:[#allocation4 + $0x7e] sm:$0xff]
  %v2051 = vsel %vm32, %v2043, 0.0
  %v2052 = vsel %vm32, %v2044, 0.0
  %v2053 = vadd.f32 %v2051, %v2052
  %v2054 = vsel %vm32, %v2045, 0.0
  %v2055 = vadd.f32 %v2053, %v2054
  %v2056 = vsel %vm32, %v2046, 0.0
  %v2057 = vadd.f32 %v2055, %v2056
  %v2058 = vsel %vm32, %v2047, 0.0
  %v2059 = vadd.f32 %v2057, %v2058
  %v2060 = vsel %vm32, %v2048, 0.0
  %v2061 = vadd.f32 %v2059, %v2060
  %v2062 = vsel %vm32, %v2049, 0.0
  %v2063 = vadd.f32 %v2061, %v2062
  %v2064 = vsel %vm32, %v2050, 0.0
  %v2065 = vadd.f32 %v2063, %v2064
  %v2066 = vrot.slane %v2065, 4
  %v2067 = vadd.f32 %v2065, %v2066
  %v2068 = vrot.slane %v2067, 2
  %v2069 = vadd.f32 %v2067, %v2068
  %v2070 = vrot.slane %v2069, 1
  %v2071 = vadd.f32 %v2069, %v2070
  %v2072 = vmul.f32 %v2071, %v2039
  %2073 = vst.msk [vmem:[#allocation5 + $0x1] sm:$0x1] %vm2041, %v2072
  %v2074 = vld [vmem:[#allocation5] sm:$0x3]
  %v2075 = vld [vmem:[%s7] sm:$0xff]
  %v2076 = vld [vmem:[%s7 + $0x8] sm:$0xff]
  %v2077 = vld [vmem:[%s7 + $0x10] sm:$0xff]
  %v2078 = vld [vmem:[%s7 + $0x18] sm:$0xff]
  %v2080 = vsel %vm32, %v2074, 0
  %2082 = vmatpush.msra.mxu0 0.0
  %2083 = vmatpush.msra.mxu0 0.0
  %2084 = vmatpush.msra.mxu0 0.0
  %2085 = vmatpush.msra.mxu0 0.0
  %2086 = vmatpush.msra.mxu0 0.0
  %2087 = vmatpush.msra.mxu0 0.0
  %2088 = vmatpush.msra.mxu0 0.0
  %2089 = vmatpush.msra.mxu0 0.0
  %2090 = vmatpush.msra.mxu0 0.0
  %2091 = vmatpush.msra.mxu0 0.0
  %2092 = vmatpush.msra.mxu0 0.0
  %2093 = vmatpush.msra.mxu0 0.0
  %2094 = vmatpush.msra.mxu0 %v2078
  %2095 = vmatpush.msra.mxu0 %v2077
  %2096 = vmatpush.msra.mxu0 %v2076
  %2097 = vmatpush.msra.mxu0 %v2075
  %2098 = vmatmul.f32.gmra.mxu0 %v2080
  %v2099 = vpop.f32.mrf.mxu0
  %v2100 = vadd.f32 0.0, %v2099
  %2101 = vdwg.mxu0
  %v2102 = vmax.f32 %v2100, 0.0
  %v2103 = vld [vmem:[%s8] sm:$0xff]
  %v2104 = vld [vmem:[%s8 + $0x8] sm:$0xff]
  %v2105 = vld [vmem:[%s8 + $0x10] sm:$0xff]
  %v2106 = vld [vmem:[%s8 + $0x18] sm:$0xff]
  %v2107 = vld [vmem:[%s8 + $0x20] sm:$0xff]
  %v2108 = vld [vmem:[%s8 + $0x28] sm:$0xff]
  %v2109 = vld [vmem:[%s8 + $0x30] sm:$0xff]
  %v2110 = vld [vmem:[%s8 + $0x38] sm:$0xff]
  %v2111 = vld [vmem:[%s8 + $0x40] sm:$0xff]
  %v2112 = vld [vmem:[%s8 + $0x48] sm:$0xff]
  %v2113 = vld [vmem:[%s8 + $0x50] sm:$0xff]
  %v2114 = vld [vmem:[%s8 + $0x58] sm:$0xff]
  %v2115 = vld [vmem:[%s8 + $0x60] sm:$0xff]
  %v2116 = vld [vmem:[%s8 + $0x68] sm:$0xff]
  %v2117 = vld [vmem:[%s8 + $0x70] sm:$0xff]
  %v2118 = vld [vmem:[%s8 + $0x78] sm:$0xff]
  %2119 = vmatpush.msra.mxu0 %v2118
  %2120 = vmatpush.msra.mxu0 %v2117
  %2121 = vmatpush.msra.mxu0 %v2116
  %2122 = vmatpush.msra.mxu0 %v2115
  %2123 = vmatpush.msra.mxu0 %v2114
  %2124 = vmatpush.msra.mxu0 %v2113
  %2125 = vmatpush.msra.mxu0 %v2112
  %2126 = vmatpush.msra.mxu0 %v2111
  %2127 = vmatpush.msra.mxu0 %v2110
  %2128 = vmatpush.msra.mxu0 %v2109
  %2129 = vmatpush.msra.mxu0 %v2108
  %2130 = vmatpush.msra.mxu0 %v2107
  %2131 = vmatpush.msra.mxu0 %v2106
  %2132 = vmatpush.msra.mxu0 %v2105
  %2133 = vmatpush.msra.mxu0 %v2104
  %2134 = vmatpush.msra.mxu0 %v2103
  %2135 = vmatmul.f32.gmra.mxu0 %v2102
  %v2136 = vpop.f32.mrf.mxu0
  %v2137 = vadd.f32 0.0, %v2136
  %2138 = vdwg.mxu0
  %v2139 = vxor.u32 %v2137, 2147483648
  %v2140 = vmul.f32 %v2139, 1.442695
  %v2141 = vpow.pop %v2140
  %v2142 = vadd.f32 %v2141, 1.0
  %v2143 = vrcp.pop %v2142
  %v2144 = vmul.f32 %v2142, %v2143
  %v2145 = vsub.f32 1.0, %v2144
  %v2146 = vmul.f32 %v2143, %v2145
  %v2147 = vadd.f32 %v2143, %v2146
  %vm2148 = vweird.f32 %v2142
  %vm2149 = vweird.f32 %v2143
  %vm2150 = vmor %vm2148, %vm2149
  %v2151 = vsel %vm2150, %v2143, %v2147
  %v2152 = vand.u32 2147483647, %v2142
  %vm2153 = vcmp.eq.f32.partialorder %v2152, 8.507059e+37
  %v2154 = vand.u32 %v2142, 2147483648
  %v2155 = vor.u32 1.1754944e-38, %v2154
  %v2156 = vsel %vm2153, %v2155, %v2151
  %v2157 = vmul.f32 1.0, %v2156
  %vm2158 = vcmask 254976
  %2159 = vst.msk [vmem:[#allocation5] sm:$0x3] %vm2158, %v2157
  %v2160 = vld [vmem:[#allocation4] sm:$0xff]
  %v2161 = vld [vmem:[#allocation4 + $0x8] sm:$0xff]
  %v2162 = vld [vmem:[#allocation4 + $0x10] sm:$0xff]
  %v2163 = vld [vmem:[#allocation4 + $0x18] sm:$0xff]
  %v2164 = vld [vmem:[#allocation4 + $0x20] sm:$0xff]
  %v2165 = vld [vmem:[#allocation4 + $0x28] sm:$0xff]
  %v2166 = vld [vmem:[#allocation4 + $0x30] sm:$0xff]
  %v2167 = vld [vmem:[#allocation4 + $0x38] sm:$0xff]
  %v2168 = vld [vmem:[#allocation5] sm:$0x1]
  %v2169 = vperm.slane %v2168, 0
  %v2170 = vmul.f32 %v2160, %v2169
  %v2171 = vmul.f32 %v2161, %v2169
  %v2172 = vmul.f32 %v2162, %v2169
  %v2173 = vmul.f32 %v2163, %v2169
  %v2174 = vmul.f32 %v2164, %v2169
  %v2175 = vmul.f32 %v2165, %v2169
  %v2176 = vmul.f32 %v2166, %v2169
  %v2177 = vmul.f32 %v2167, %v2169
  %v2178 = vld [vmem:[%s0] sm:$0xff]
  %v2179 = vld [vmem:[%s0 + $0x8] sm:$0xff]
  %v2180 = vld [vmem:[%s0 + $0x10] sm:$0xff]
  %v2181 = vld [vmem:[%s0 + $0x18] sm:$0xff]
  %v2182 = vld [vmem:[%s0 + $0x20] sm:$0xff]
  %v2183 = vld [vmem:[%s0 + $0x28] sm:$0xff]
  %v2184 = vld [vmem:[%s0 + $0x30] sm:$0xff]
  %v2185 = vld [vmem:[%s0 + $0x38] sm:$0xff]
  %v2186 = vadd.f32 %v2170, %v2178
  %v2187 = vadd.f32 %v2171, %v2179
  %v2188 = vadd.f32 %v2172, %v2180
  %v2189 = vadd.f32 %v2173, %v2181
  %v2190 = vadd.f32 %v2174, %v2182
  %v2191 = vadd.f32 %v2175, %v2183
  %v2192 = vadd.f32 %v2176, %v2184
  %v2193 = vadd.f32 %v2177, %v2185
  %v2194 = vmax.f32 %v2186, 0.0
  %v2195 = vmax.f32 %v2187, 0.0
  %v2196 = vmax.f32 %v2188, 0.0
  %v2197 = vmax.f32 %v2189, 0.0
  %v2198 = vmax.f32 %v2190, 0.0
  %v2199 = vmax.f32 %v2191, 0.0
  %v2200 = vmax.f32 %v2192, 0.0
  %v2201 = vmax.f32 %v2193, 0.0
  %2202 = vst.msk [vmem:[%s9] sm:$0xff] %vm32, %v2194
  %2203 = vst.msk [vmem:[%s9 + $0x8] sm:$0xff] %vm32, %v2195
  %2204 = vst.msk [vmem:[%s9 + $0x10] sm:$0xff] %vm32, %v2196
  %2205 = vst.msk [vmem:[%s9 + $0x18] sm:$0xff] %vm32, %v2197
  %2206 = vst.msk [vmem:[%s9 + $0x20] sm:$0xff] %vm32, %v2198
  %2207 = vst.msk [vmem:[%s9 + $0x28] sm:$0xff] %vm32, %v2199
  %2208 = vst.msk [vmem:[%s9 + $0x30] sm:$0xff] %vm32, %v2200
  %2209 = vst.msk [vmem:[%s9 + $0x38] sm:$0xff] %vm32, %v2201
  %v2210 = vld [vmem:[#allocation4 + $0x46] sm:$0xff]
  %v2211 = vld [vmem:[#allocation4 + $0x4e] sm:$0xff]
  %v2212 = vld [vmem:[#allocation4 + $0x56] sm:$0xff]
  %v2213 = vld [vmem:[#allocation4 + $0x5e] sm:$0xff]
  %v2214 = vld [vmem:[#allocation4 + $0x66] sm:$0xff]
  %v2215 = vld [vmem:[#allocation4 + $0x6e] sm:$0xff]
  %v2216 = vld [vmem:[#allocation4 + $0x76] sm:$0xff]
  %v2217 = vld [vmem:[#allocation4 + $0x7e] sm:$0xff]
  %v2218 = vld [vmem:[#allocation5 + $0x1] sm:$0x1]
  %v2219 = vperm.slane %v2218, 0
  %v2220 = vmul.f32 %v2210, %v2219
  %v2221 = vmul.f32 %v2211, %v2219
  %v2222 = vmul.f32 %v2212, %v2219
  %v2223 = vmul.f32 %v2213, %v2219
  %v2224 = vmul.f32 %v2214, %v2219
  %v2225 = vmul.f32 %v2215, %v2219
  %v2226 = vmul.f32 %v2216, %v2219
  %v2227 = vmul.f32 %v2217, %v2219
  %v2228 = vld [vmem:[%s87] sm:$0xff]
  %v2229 = vld [vmem:[%s87 + $0x8] sm:$0xff]
  %v2230 = vld [vmem:[%s87 + $0x10] sm:$0xff]
  %v2231 = vld [vmem:[%s87 + $0x18] sm:$0xff]
  %v2232 = vld [vmem:[%s87 + $0x20] sm:$0xff]
  %v2233 = vld [vmem:[%s87 + $0x28] sm:$0xff]
  %v2234 = vld [vmem:[%s87 + $0x30] sm:$0xff]
  %v2235 = vld [vmem:[%s87 + $0x38] sm:$0xff]
  %v2236 = vadd.f32 %v2220, %v2228
  %v2237 = vadd.f32 %v2221, %v2229
  %v2238 = vadd.f32 %v2222, %v2230
  %v2239 = vadd.f32 %v2223, %v2231
  %v2240 = vadd.f32 %v2224, %v2232
  %v2241 = vadd.f32 %v2225, %v2233
  %v2242 = vadd.f32 %v2226, %v2234
  %v2243 = vadd.f32 %v2227, %v2235
  %v2244 = vmax.f32 %v2236, 0.0
  %v2245 = vmax.f32 %v2237, 0.0
  %v2246 = vmax.f32 %v2238, 0.0
  %v2247 = vmax.f32 %v2239, 0.0
  %v2248 = vmax.f32 %v2240, 0.0
  %v2249 = vmax.f32 %v2241, 0.0
  %v2250 = vmax.f32 %v2242, 0.0
  %v2251 = vmax.f32 %v2243, 0.0
  %s2252 = scalar_lea.vmem %s9, 64
  %2253 = vst.msk [vmem:[%s2252] sm:$0xff] %vm32, %v2244
  %2254 = vst.msk [vmem:[%s2252 + $0x8] sm:$0xff] %vm32, %v2245
  %2255 = vst.msk [vmem:[%s2252 + $0x10] sm:$0xff] %vm32, %v2246
  %2256 = vst.msk [vmem:[%s2252 + $0x18] sm:$0xff] %vm32, %v2247
  %2257 = vst.msk [vmem:[%s2252 + $0x20] sm:$0xff] %vm32, %v2248
  %2258 = vst.msk [vmem:[%s2252 + $0x28] sm:$0xff] %vm32, %v2249
  %2259 = vst.msk [vmem:[%s2252 + $0x30] sm:$0xff] %vm32, %v2250
  %2260 = vst.msk [vmem:[%s2252 + $0x38] sm:$0xff] %vm32, %v2251
  // Predicated region
  $region38: #{tpu_custom_call.1} parent=0 // pred_check
    _
  $region39: #{tpu_custom_call.1} parent=0 // pred_check_branch
    %2262 = sbr.rel (0) target = $region41
  $region40: #{tpu_custom_call.1} parent=0 // pred_region
    _
  $region41: #{tpu_custom_call.1} parent=0 // pred_fallthru
    _
  // Predicated region
  $region42: #{tpu_custom_call.1} parent=0 // pred_check
    _
  $region43: #{tpu_custom_call.1} parent=0 // pred_check_branch
    %2264 = sbr.rel (0) target = $region45
  $region44: #{tpu_custom_call.1} parent=0 // pred_region
    _
  $region45: #{tpu_custom_call.1} parent=0 // pred_fallthru
    _

</llo_original>
